<compile_context>
chip_gen: v7x
topology: tpu7x:2x2x1
jax: 0.10.0
libtpu: 0.0.40
codegen_flags: <defaults>
</compile_context>

<pallas_src>
import functools
import math

import jax
import jax.numpy as jnp
from jax import lax
from jax.experimental import pallas as pl
from jax.experimental.pallas import tpu as pltpu


# ----------------------------------------------------------------------------
# Small helpers
# ----------------------------------------------------------------------------

def _gelu_new(x):
    # GPT-2 "gelu_new" (tanh approximation), computed in f32 on the VPU/EUP.
    return 0.5 * x * (1.0 + jnp.tanh(
        jnp.sqrt(2.0 / jnp.pi) * (x + 0.044715 * x * x * x)))


def _tile(dim, cap):
    """Largest divisor of `dim` that is <= cap."""
    t = min(dim, cap)
    while dim % t:
        t -= 1
    return t


# ----------------------------------------------------------------------------
# Pallas kernels
# ----------------------------------------------------------------------------

def _ln_dense_kernel(x_ref, g_ref, bln_ref, w_ref, b_ref, o_ref, *, activation):
    """Fused LayerNorm(x) @ W + b (+ gelu).  Full K per block (LN needs the row).

    x:(tm,K)  g,bln:(1,K)  w:(K,tn)  b:(1,tn)  o:(tm,tn)
    LN / GELU math stays in f32 (v5e has no bf16 VPU/EUP); MXU operands are bf16.
    """
    x = x_ref[...].astype(jnp.float32)
    mean = jnp.mean(x, axis=-1, keepdims=True)
    var = jnp.mean(jnp.square(x - mean), axis=-1, keepdims=True)
    xn = (x - mean) * lax.rsqrt(var + 1e-5)
    xn = xn * g_ref[...].astype(jnp.float32) + bln_ref[...].astype(jnp.float32)
    y = jnp.dot(xn.astype(jnp.bfloat16), w_ref[...].astype(jnp.bfloat16),
                preferred_element_type=jnp.float32)
    y = y + b_ref[...].astype(jnp.float32)
    if activation == "gelu":
        y = _gelu_new(y)
    o_ref[...] = y.astype(o_ref.dtype)


def _dense_acc_kernel(x_ref, w_ref, b_ref, res_ref, o_ref, acc_ref):
    """Tiled o = x @ w + b + res, K-axis accumulation in f32 VMEM scratch.

    Grid is (M-blocks, N-blocks, K-blocks); K is the innermost (arbitrary) axis.
    MXU operands are bf16, accumulation f32.
    """
    kk = pl.program_id(2)

    @pl.when(kk == 0)
    def _():
        acc_ref[...] = jnp.zeros_like(acc_ref)

    acc_ref[...] += jnp.dot(x_ref[...].astype(jnp.bfloat16),
                            w_ref[...].astype(jnp.bfloat16),
                            preferred_element_type=jnp.float32)

    @pl.when(kk == pl.num_programs(2) - 1)
    def _():
        y = acc_ref[...] + b_ref[...].astype(jnp.float32)
        y = y + res_ref[...].astype(jnp.float32)
        o_ref[...] = y.astype(o_ref.dtype)


def _layernorm_kernel(x_ref, g_ref, b_ref, o_ref):
    """Standalone LayerNorm over last axis (used only for final ln_f)."""
    x = x_ref[...].astype(jnp.float32)
    mean = jnp.mean(x, axis=-1, keepdims=True)
    var = jnp.mean(jnp.square(x - mean), axis=-1, keepdims=True)
    y = (x - mean) * lax.rsqrt(var + 1e-5)
    y = y * g_ref[...].astype(jnp.float32) + b_ref[...].astype(jnp.float32)
    o_ref[...] = y.astype(o_ref.dtype)


def _attn_kernel(q_ref, k_ref, v_ref, o_ref, *, n_heads_blk, dh):
    """Causal self-attention for one (batch, head-group).

    Blocks are (1, T, n_heads_blk*dh) sliced straight out of the (B, T, H)
    q/k/v tensors by the BlockSpec index_map (no host-side transposes).
    Heads inside the block are processed with static slices; the concatenated
    store is lane-dense (n_heads_blk*dh >= 128 when dh allows).
    """
    # TODO(synk): for long sequences, tile over the KV axis (flash-style online
    # softmax) instead of materializing the full (T, T) score matrix.
    q = q_ref[0].astype(jnp.float32)   # (T, hp*dh)
    k = k_ref[0].astype(jnp.float32)
    v = v_ref[0].astype(jnp.float32)
    t = q.shape[0]
    row = lax.broadcasted_iota(jnp.int32, (t, t), 0)
    col = lax.broadcasted_iota(jnp.int32, (t, t), 1)
    causal = row >= col
    scale = 1.0 / math.sqrt(dh)

    outs = []
    for j in range(n_heads_blk):
        qj = (q[:, j * dh:(j + 1) * dh] * scale).astype(jnp.bfloat16)
        kj = k[:, j * dh:(j + 1) * dh].astype(jnp.bfloat16)
        vj = v[:, j * dh:(j + 1) * dh].astype(jnp.bfloat16)
        # No k.T materialization: contract the last dims directly.
        s = lax.dot_general(qj, kj, (((1,), (1,)), ((), ())),
                            preferred_element_type=jnp.float32)
        s = jnp.where(causal, s, -1e30)
        s = s - jnp.max(s, axis=-1, keepdims=True)
        p = jnp.exp(s)
        p = p * pl.reciprocal(jnp.sum(p, axis=-1, keepdims=True), approx=True)
        outs.append(jnp.dot(p.astype(jnp.bfloat16), vj,
                            preferred_element_type=jnp.float32))
    o_ref[0] = jnp.concatenate(outs, axis=-1).astype(o_ref.dtype)


# ----------------------------------------------------------------------------
# Wrappers around pallas_call
# ----------------------------------------------------------------------------

def pallas_ln_dense(x2d, gamma, beta, w, b, activation=None, *,
                    tm_cap=256, tn_cap=512):
    """o = act(LayerNorm(x) @ w + b).  Grid over (M, N); full K per block."""
    m, kdim = x2d.shape
    _, n = w.shape
    tm = _tile(m, tm_cap)
    tn = _tile(n, tn_cap)
    return pl.pallas_call(
        functools.partial(_ln_dense_kernel, activation=activation),
        out_shape=jax.ShapeDtypeStruct((m, n), x2d.dtype),
        grid=(m // tm, n // tn),
        in_specs=[
            pl.BlockSpec((tm, kdim), lambda i, j: (i, 0)),
            pl.BlockSpec((1, kdim), lambda i, j: (0, 0)),
            pl.BlockSpec((1, kdim), lambda i, j: (0, 0)),
            pl.BlockSpec((kdim, tn), lambda i, j: (0, j)),
            pl.BlockSpec((1, tn), lambda i, j: (0, j)),
        ],
        out_specs=pl.BlockSpec((tm, tn), lambda i, j: (i, j)),
        compiler_params=pltpu.CompilerParams(
            dimension_semantics=("parallel", "parallel")),
    )(x2d, gamma.reshape(1, kdim), beta.reshape(1, kdim), w, b.reshape(1, n))


def pallas_dense_res(x2d, w, b, res, *, tm_cap=256, tn_cap=512, tk_cap=512):
    """o = x @ w + b + res, fully tiled over (M, N, K) with f32 accumulator.

    `res` has shape (rm, N) with rm | M (rm == M for residual streams,
    rm == T for the broadcast position-embedding add); its M-block index is
    taken modulo (rm // tm), so the add is fused into the epilogue.
    """
    m, kdim = x2d.shape
    _, n = w.shape
    rm, rn = res.shape
    assert rn == n and m % rm == 0
    tm = _tile(rm, tm_cap)          # tm divides rm, hence also m
    tn = _tile(n, tn_cap)
    tk = _tile(kdim, tk_cap)
    rbm = rm // tm
    grid = (m // tm, n // tn, kdim // tk)
    return pl.pallas_call(
        _dense_acc_kernel,
        out_shape=jax.ShapeDtypeStruct((m, n), x2d.dtype),
        grid=grid,
        in_specs=[
            pl.BlockSpec((tm, tk), lambda i, j, kk: (i, kk)),
            pl.BlockSpec((tk, tn), lambda i, j, kk: (kk, j)),
            pl.BlockSpec((1, tn), lambda i, j, kk: (0, j)),
            pl.BlockSpec((tm, tn), lambda i, j, kk: (i % rbm, j)),
        ],
        out_specs=pl.BlockSpec((tm, tn), lambda i, j, kk: (i, j)),
        scratch_shapes=[pltpu.VMEM((tm, tn), jnp.float32)],
        compiler_params=pltpu.CompilerParams(
            dimension_semantics=("parallel", "parallel", "arbitrary")),
    )(x2d, w, b.reshape(1, n), res)


def pallas_layernorm(x2d, gamma, beta, *, tm_cap=256):
    m, h = x2d.shape
    tm = _tile(m, tm_cap)
    return pl.pallas_call(
        _layernorm_kernel,
        out_shape=jax.ShapeDtypeStruct((m, h), x2d.dtype),
        grid=(m // tm,),
        in_specs=[
            pl.BlockSpec((tm, h), lambda i: (i, 0)),
            pl.BlockSpec((1, h), lambda i: (0, 0)),
            pl.BlockSpec((1, h), lambda i: (0, 0)),
        ],
        out_specs=pl.BlockSpec((tm, h), lambda i: (i, 0)),
        compiler_params=pltpu.CompilerParams(dimension_semantics=("parallel",)),
    )(x2d, gamma.reshape(1, h), beta.reshape(1, h))


def pallas_causal_attention(q, k, v, n_head):
    """q,k,v: (B, T, H).  Head split done purely via BlockSpec index_map."""
    b, t, hdim = q.shape
    dh = hdim // n_head
    # Pack heads so the block lane width is >=128 where possible (dh=64 -> 2 heads).
    hp = min(n_head, max(1, 128 // dh))
    while n_head % hp:
        hp -= 1
    n_groups = n_head // hp
    blk = hp * dh
    spec = pl.BlockSpec((1, t, blk), lambda bi, g: (bi, 0, g))
    return pl.pallas_call(
        functools.partial(_attn_kernel, n_heads_blk=hp, dh=dh),
        out_shape=jax.ShapeDtypeStruct((b, t, hdim), q.dtype),
        grid=(b, n_groups),
        in_specs=[spec, spec, spec],
        out_specs=pl.BlockSpec((1, t, blk), lambda bi, g: (bi, 0, g)),
        compiler_params=pltpu.CompilerParams(
            dimension_semantics=("parallel", "parallel")),
    )(q, k, v)


# ----------------------------------------------------------------------------
# GPT-2 forward (all hot paths in Pallas; reshapes below are metadata-only)
# ----------------------------------------------------------------------------

def gpt2_block(p, h2, b, t, n_head):
    hdim = h2.shape[1]

    # --- attention: fused LN + per-projection dense (head split via BlockSpec) ---
    q = pallas_ln_dense(h2, p["ln1_g"], p["ln1_b"], p["q_w"], p["q_b"])
    k = pallas_ln_dense(h2, p["ln1_g"], p["ln1_b"], p["k_w"], p["k_b"])
    v = pallas_ln_dense(h2, p["ln1_g"], p["ln1_b"], p["v_w"], p["v_b"])
    a = pallas_causal_attention(q.reshape(b, t, hdim), k.reshape(b, t, hdim),
                                v.reshape(b, t, hdim), n_head)
    # output projection with the residual add fused into the epilogue
    h_attn = pallas_dense_res(a.reshape(b * t, hdim),
                              p["attn_proj_w"], p["attn_proj_b"], h2)

    # --- MLP: fused LN + fc + gelu, then proj with fused residual ---
    fc = pallas_ln_dense(h_attn, p["ln2_g"], p["ln2_b"], p["fc_w"], p["fc_b"],
                         activation="gelu")
    h_out = pallas_dense_res(fc, p["mlp_proj_w"], p["mlp_proj_b"], h_attn)
    return h_out


def proj_timeseries_gpt2_forward(params, x, n_head):
    """x: (B, T, D) float32 -> last_hidden_state (B, T, H)."""
    b, t, d = x.shape
    hdim = params["proj_w"].shape[1]
    # nn.Linear(D, H) with the wpe position-embedding add fused in the epilogue
    # (wte unused because inputs_embeds is given; dropout is identity in eval).
    wpe_t = params["wpe"][:t]                                   # (T, H)
    h = pallas_dense_res(x.reshape(b * t, d),
                         params["proj_w"], params["proj_b"], wpe_t)
    for blk in params["blocks"]:
        h = gpt2_block(blk, h, b, t, n_head)
    hf = pallas_layernorm(h, params["ln_f_g"], params["ln_f_b"])
    return hf.reshape(b, t, hdim)


# ----------------------------------------------------------------------------
# Pure-JAX reference (f32 everywhere) for a sanity check
# ----------------------------------------------------------------------------

def _ref_ln(x, g, bta):
    m = jnp.mean(x, -1, keepdims=True)
    v = jnp.mean(jnp.square(x - m), -1, keepdims=True)
    return (x - m) / jnp.sqrt(v + 1e-5) * g + bta


def reference_forward(params, x, n_head):
    b, t, d = x.shape
    hdim = params["proj_w"].shape[1]
    dh = hdim // n_head
    h = x @ params["proj_w"] + params["proj_b"]
    h = h + params["wpe"][:t][None, :, :]
    for p in params["blocks"]:
        ln1 = _ref_ln(h, p["ln1_g"], p["ln1_b"])

        def heads(y):
            return y.reshape(b, t, n_head, dh).transpose(0, 2, 1, 3)

        q = heads(ln1 @ p["q_w"] + p["q_b"])
        k = heads(ln1 @ p["k_w"] + p["k_b"])
        v = heads(ln1 @ p["v_w"] + p["v_b"])
        s = jnp.einsum("bhqd,bhkd->bhqk", q, k) / math.sqrt(dh)
        mask = jnp.tril(jnp.ones((t, t), bool))
        s = jnp.where(mask[None, None], s, -1e30)
        a = jax.nn.softmax(s, axis=-1)
        o = jnp.einsum("bhqk,bhkd->bhqd", a, v).transpose(0, 2, 1, 3).reshape(b, t, hdim)
        h = h + (o @ p["attn_proj_w"] + p["attn_proj_b"])
        ln2 = _ref_ln(h, p["ln2_g"], p["ln2_b"])
        fc = _gelu_new(ln2 @ p["fc_w"] + p["fc_b"])
        h = h + (fc @ p["mlp_proj_w"] + p["mlp_proj_b"])
    return _ref_ln(h, params["ln_f_g"], params["ln_f_b"])


# ----------------------------------------------------------------------------
# Deterministic parameter init (synthetic small GPT-2 config)
# ----------------------------------------------------------------------------

def init_params(key, D, hidden, n_layer, max_pos):
    def nrm(k, shape, std=0.02):
        return (std * jax.random.normal(k, shape)).astype(jnp.float32)

    keys = jax.random.split(key, 4 + n_layer)
    params = {
        "proj_w": nrm(keys[0], (D, hidden)),
        "proj_b": jnp.zeros((hidden,), jnp.float32),
        "wpe": nrm(keys[1], (max_pos, hidden), std=0.01),
        "ln_f_g": jnp.ones((hidden,), jnp.float32),
        "ln_f_b": jnp.zeros((hidden,), jnp.float32),
        "blocks": [],
    }
    for li in range(n_layer):
        bk = jax.random.split(keys[4 + li], 4)
        attn_w = nrm(bk[0], (hidden, 3 * hidden))   # HF Conv1D layout (H, 3H), split
        params["blocks"].append({
            "ln1_g": jnp.ones((hidden,), jnp.float32),
            "ln1_b": jnp.zeros((hidden,), jnp.float32),
            "q_w": attn_w[:, :hidden],
            "q_b": jnp.zeros((hidden,), jnp.float32),
            "k_w": attn_w[:, hidden:2 * hidden],
            "k_b": jnp.zeros((hidden,), jnp.float32),
            "v_w": attn_w[:, 2 * hidden:],
            "v_b": jnp.zeros((hidden,), jnp.float32),
            "attn_proj_w": nrm(bk[1], (hidden, hidden)),
            "attn_proj_b": jnp.zeros((hidden,), jnp.float32),
            "ln2_g": jnp.ones((hidden,), jnp.float32),
            "ln2_b": jnp.zeros((hidden,), jnp.float32),
            "fc_w": nrm(bk[2], (hidden, 4 * hidden)),
            "fc_b": jnp.zeros((4 * hidden,), jnp.float32),
            "mlp_proj_w": nrm(bk[3], (4 * hidden, hidden)),
            "mlp_proj_b": jnp.zeros((hidden,), jnp.float32),
        })
    return params


if __name__ == "__main__":
    # Small synthetic config (real gpt2: H=768, 12 heads, 12 layers).
    B, T, D = 2, 8, 8
    HIDDEN, N_HEAD, N_LAYER, MAX_POS = 32, 4, 2, 16

    root = jax.random.PRNGKey(0)
    pkey, xkey = jax.random.split(root)
    params = init_params(pkey, D, HIDDEN, N_LAYER, MAX_POS)
    x = jax.random.normal(xkey, (B, T, D), dtype=jnp.float32)

    fwd = jax.jit(functools.partial(proj_timeseries_gpt2_forward, n_head=N_HEAD))
    out = fwd(params, x)
    jax.block_until_ready(out)

    assert out.shape == (B, T, HIDDEN), out.shape
    ref = reference_forward(params, x, N_HEAD)
    # bf16 MXU operands (f32 accumulation) vs pure-f32 reference.
    assert jnp.allclose(out, ref, rtol=2e-2, atol=2e-2), float(jnp.max(jnp.abs(out - ref)))

    print("KERNEL_OK")
</pallas_src>

<mosaic_0001>
module attributes {stable_mosaic.version = 11 : i64} {
  func.func @_dense_acc_kernel(%arg0: i32, %arg1: i32, %arg2: i32, %arg3: memref<8x8xf32, #tpu.memory_space<vmem>>, %arg4: memref<8x32xf32, #tpu.memory_space<vmem>>, %arg5: memref<1x32xf32, #tpu.memory_space<vmem>>, %arg6: memref<8x32xf32, #tpu.memory_space<vmem>>, %arg7: memref<8x32xf32, #tpu.memory_space<vmem>>, %arg8: memref<8x32xf32, #tpu.memory_space<vmem>>) attributes {dimension_semantics = [#tpu.dimension_semantics<parallel>, #tpu.dimension_semantics<parallel>, #tpu.dimension_semantics<arbitrary>], iteration_bounds = array<i64: 2, 1, 1>, scalar_prefetch = 0 : i64, scratch_operands = 1 : i64, tpu.core_type = #tpu.core_type<tc>, window_params = [{transform_indices = @transform_0, window_bounds = array<i64: 8, 8>}, {transform_indices = @transform_1, window_bounds = array<i64: 8, 32>}, {transform_indices = @transform_2, window_bounds = array<i64: 1, 32>}, {transform_indices = @transform_3, window_bounds = array<i64: 8, 32>}, {transform_indices = @transform_4, window_bounds = array<i64: 8, 32>}]} {
    %c0_i32 = arith.constant 0 : i32
    %0 = arith.cmpi eq, %arg2, %c0_i32 : i32
    %1 = arith.extui %0 : i1 to i32
    %c0_i32_0 = arith.constant 0 : i32
    %2 = arith.cmpi ne, %1, %c0_i32_0 : i32
    scf.if %2 {
      %cst_10 = arith.constant 0.000000e+00 : f32
      %14 = vector.broadcast %cst_10 : f32 to vector<8x32xf32>
      %c0_11 = arith.constant 0 : index
      %c0_12 = arith.constant 0 : index
      %15 = vector.load %arg8[%c0_11, %c0_12] : memref<8x32xf32, #tpu.memory_space<vmem>>, vector<8x32xf32>
      tpu.vector_store %arg8[%c0_11, %c0_12], %14 {strides = array<i32>} : memref<8x32xf32, #tpu.memory_space<vmem>>, vector<8x32xf32>,
    } else {
    }
    %c0 = arith.constant 0 : index
    %c0_1 = arith.constant 0 : index
    %3 = vector.load %arg8[%c0, %c0_1] : memref<8x32xf32, #tpu.memory_space<vmem>>, vector<8x32xf32>
    %c0_2 = arith.constant 0 : index
    %c0_3 = arith.constant 0 : index
    %4 = vector.load %arg3[%c0_2, %c0_3] : memref<8x8xf32, #tpu.memory_space<vmem>>, vector<8x8xf32>
    %5 = arith.truncf %4 : vector<8x8xf32> to vector<8x8xbf16>
    %c0_4 = arith.constant 0 : index
    %c0_5 = arith.constant 0 : index
    %6 = vector.load %arg4[%c0_4, %c0_5] : memref<8x32xf32, #tpu.memory_space<vmem>>, vector<8x32xf32>
    %7 = arith.truncf %6 : vector<8x32xf32> to vector<8x32xbf16>
    %cst = arith.constant dense<0.000000e+00> : vector<8x32xf32>
    %8 = tpu.matmul %5, %7, %cst {dimension_numbers = #tpu.dot_dimension_numbers<[1], [0], [0], [1], [0, 0, 1, 1], [], []>} : vector<8x8xbf16>, vector<8x32xbf16>, vector<8x32xf32> -> vector<8x32xf32>
    %9 = arith.addf %3, %8 : vector<8x32xf32>
    %c0_6 = arith.constant 0 : index
    %c0_7 = arith.constant 0 : index
    %10 = vector.load %arg8[%c0_6, %c0_7] : memref<8x32xf32, #tpu.memory_space<vmem>>, vector<8x32xf32>
    tpu.vector_store %arg8[%c0_6, %c0_7], %9 {strides = array<i32>} : memref<8x32xf32, #tpu.memory_space<vmem>>, vector<8x32xf32>,
    %c0_i32_8 = arith.constant 0 : i32
    %11 = arith.cmpi eq, %arg2, %c0_i32_8 : i32
    %12 = arith.extui %11 : i1 to i32
    %c0_i32_9 = arith.constant 0 : i32
    %13 = arith.cmpi ne, %12, %c0_i32_9 : i32
    scf.if %13 {
      %c0_10 = arith.constant 0 : index
      %c0_11 = arith.constant 0 : index
      %14 = vector.load %arg8[%c0_10, %c0_11] : memref<8x32xf32, #tpu.memory_space<vmem>>, vector<8x32xf32>
      %c0_12 = arith.constant 0 : index
      %c0_13 = arith.constant 0 : index
      %15 = vector.load %arg5[%c0_12, %c0_13] : memref<1x32xf32, #tpu.memory_space<vmem>>, vector<1x32xf32>
      %16 = vector.broadcast %15 : vector<1x32xf32> to vector<8x32xf32>
      %17 = arith.addf %14, %16 : vector<8x32xf32>
      %c0_14 = arith.constant 0 : index
      %c0_15 = arith.constant 0 : index
      %18 = vector.load %arg6[%c0_14, %c0_15] : memref<8x32xf32, #tpu.memory_space<vmem>>, vector<8x32xf32>
      %19 = arith.addf %17, %18 : vector<8x32xf32>
      %c0_16 = arith.constant 0 : index
      %c0_17 = arith.constant 0 : index
      %20 = vector.load %arg7[%c0_16, %c0_17] : memref<8x32xf32, #tpu.memory_space<vmem>>, vector<8x32xf32>
      tpu.vector_store %arg7[%c0_16, %c0_17], %19 {strides = array<i32>} : memref<8x32xf32, #tpu.memory_space<vmem>>, vector<8x32xf32>,
    } else {
    }
    return
  }
  func.func @transform_0(%arg0: i32, %arg1: i32, %arg2: i32) -> (i32, i32) {
    %c0_i32 = arith.constant 0 : i32
    return %arg0, %arg2 : i32, i32
  }
  func.func @transform_1(%arg0: i32, %arg1: i32, %arg2: i32) -> (i32, i32) {
    %c0_i32 = arith.constant 0 : i32
    return %arg2, %arg1 : i32, i32
  }
  func.func @transform_2(%arg0: i32, %arg1: i32, %arg2: i32) -> (i32, i32) {
    %c0_i32 = arith.constant 0 : i32
    %c0_i32_0 = arith.constant 0 : i32
    return %c0_i32, %arg1 : i32, i32
  }
  func.func @transform_3(%arg0: i32, %arg1: i32, %arg2: i32) -> (i32, i32) {
    %c1_i32 = arith.constant 1 : i32
    %c0_i32 = arith.constant 0 : i32
    %0 = arith.cmpi eq, %c1_i32, %c0_i32 : i32
    %c1_i32_0 = arith.constant 1 : i32
    %1 = arith.select %0, %c1_i32_0, %c1_i32 : i32
    %2 = arith.remsi %arg0, %1 : i32
    %c0_i32_1 = arith.constant 0 : i32
    %3 = arith.cmpi ne, %2, %c0_i32_1 : i32
    %c0_i32_2 = arith.constant 0 : i32
    %4 = arith.cmpi slt, %2, %c0_i32_2 : i32
    %c0_i32_3 = arith.constant 0 : i32
    %5 = arith.cmpi slt, %1, %c0_i32_3 : i32
    %6 = arith.xori %4, %5 : i1
    %7 = arith.andi %6, %3 : i1
    %8 = arith.addi %2, %1 : i32
    %9 = arith.select %7, %8, %2 : i32
    %c0_i32_4 = arith.constant 0 : i32
    return %9, %arg1 : i32, i32
  }
  func.func @transform_4(%arg0: i32, %arg1: i32, %arg2: i32) -> (i32, i32) {
    %c0_i32 = arith.constant 0 : i32
    return %arg0, %arg1 : i32, i32
  }
}

module attributes {stable_mosaic.version = 11 : i64} {
  func.func @_ln_dense_kernel(%arg0: i32, %arg1: i32, %arg2: memref<16x32xf32, #tpu.memory_space<vmem>>, %arg3: memref<1x32xf32, #tpu.memory_space<vmem>>, %arg4: memref<1x32xf32, #tpu.memory_space<vmem>>, %arg5: memref<32x32xf32, #tpu.memory_space<vmem>>, %arg6: memref<1x32xf32, #tpu.memory_space<vmem>>, %arg7: memref<16x32xf32, #tpu.memory_space<vmem>>) attributes {dimension_semantics = [#tpu.dimension_semantics<parallel>, #tpu.dimension_semantics<parallel>], iteration_bounds = array<i64: 1, 1>, scalar_prefetch = 0 : i64, scratch_operands = 0 : i64, tpu.core_type = #tpu.core_type<tc>, window_params = [{transform_indices = @transform_0, window_bounds = array<i64: 16, 32>}, {pipeline_mode = #tpu.pipeline_mode<synchronous>, transform_indices = @transform_1, window_bounds = array<i64: 1, 32>}, {pipeline_mode = #tpu.pipeline_mode<synchronous>, transform_indices = @transform_2, window_bounds = array<i64: 1, 32>}, {transform_indices = @transform_3, window_bounds = array<i64: 32, 32>}, {transform_indices = @transform_4, window_bounds = array<i64: 1, 32>}, {transform_indices = @transform_5, window_bounds = array<i64: 16, 32>}]} {
    %c0 = arith.constant 0 : index
    %c0_0 = arith.constant 0 : index
    %0 = vector.load %arg2[%c0, %c0_0] : memref<16x32xf32, #tpu.memory_space<vmem>>, vector<16x32xf32>
    %cst = arith.constant dense<0.000000e+00> : vector<16xf32>
    %1 = vector.multi_reduction <add>, %0, %cst [1] : vector<16x32xf32> to vector<16xf32>
    %2 = vector.shape_cast %1 : vector<16xf32> to vector<16x1xf32>
    %cst_1 = arith.constant 3.200000e+01 : f32
    %3 = vector.broadcast %cst_1 : f32 to vector<16x1xf32>
    %4 = arith.divf %2, %3 : vector<16x1xf32>
    %5 = vector.broadcast %4 : vector<16x1xf32> to vector<16x32xf32>
    %6 = arith.subf %0, %5 : vector<16x32xf32>
    %7 = arith.mulf %6, %6 : vector<16x32xf32>
    %cst_2 = arith.constant dense<0.000000e+00> : vector<16xf32>
    %8 = vector.multi_reduction <add>, %7, %cst_2 [1] : vector<16x32xf32> to vector<16xf32>
    %9 = vector.shape_cast %8 : vector<16xf32> to vector<16x1xf32>
    %cst_3 = arith.constant 3.200000e+01 : f32
    %10 = vector.broadcast %cst_3 : f32 to vector<16x1xf32>
    %11 = arith.divf %9, %10 : vector<16x1xf32>
    %12 = vector.broadcast %4 : vector<16x1xf32> to vector<16x32xf32>
    %13 = arith.subf %0, %12 : vector<16x32xf32>
    %cst_4 = arith.constant 9.99999974E-6 : f32
    %14 = vector.broadcast %cst_4 : f32 to vector<16x1xf32>
    %15 = arith.addf %11, %14 : vector<16x1xf32>
    %16 = math.rsqrt %15 : vector<16x1xf32>
    %17 = vector.broadcast %16 : vector<16x1xf32> to vector<16x32xf32>
    %18 = arith.mulf %13, %17 : vector<16x32xf32>
    %c0_5 = arith.constant 0 : index
    %c0_6 = arith.constant 0 : index
    %19 = vector.load %arg3[%c0_5, %c0_6] : memref<1x32xf32, #tpu.memory_space<vmem>>, vector<1x32xf32>
    %20 = vector.broadcast %19 : vector<1x32xf32> to vector<16x32xf32>
    %21 = arith.mulf %18, %20 : vector<16x32xf32>
    %c0_7 = arith.constant 0 : index
    %c0_8 = arith.constant 0 : index
    %22 = vector.load %arg4[%c0_7, %c0_8] : memref<1x32xf32, #tpu.memory_space<vmem>>, vector<1x32xf32>
    %23 = vector.broadcast %22 : vector<1x32xf32> to vector<16x32xf32>
    %24 = arith.addf %21, %23 : vector<16x32xf32>
    %25 = arith.truncf %24 : vector<16x32xf32> to vector<16x32xbf16>
    %c0_9 = arith.constant 0 : index
    %c0_10 = arith.constant 0 : index
    %26 = vector.load %arg5[%c0_9, %c0_10] : memref<32x32xf32, #tpu.memory_space<vmem>>, vector<32x32xf32>
    %27 = arith.truncf %26 : vector<32x32xf32> to vector<32x32xbf16>
    %cst_11 = arith.constant dense<0.000000e+00> : vector<16x32xf32>
    %28 = tpu.matmul %25, %27, %cst_11 {dimension_numbers = #tpu.dot_dimension_numbers<[1], [0], [0], [1], [0, 0, 1, 1], [], []>} : vector<16x32xbf16>, vector<32x32xbf16>, vector<16x32xf32> -> vector<16x32xf32>
    %c0_12 = arith.constant 0 : index
    %c0_13 = arith.constant 0 : index
    %29 = vector.load %arg6[%c0_12, %c0_13] : memref<1x32xf32, #tpu.memory_space<vmem>>, vector<1x32xf32>
    %30 = vector.broadcast %29 : vector<1x32xf32> to vector<16x32xf32>
    %31 = arith.addf %28, %30 : vector<16x32xf32>
    %c0_14 = arith.constant 0 : index
    %c0_15 = arith.constant 0 : index
    %32 = vector.load %arg7[%c0_14, %c0_15] : memref<16x32xf32, #tpu.memory_space<vmem>>, vector<16x32xf32>
    tpu.vector_store %arg7[%c0_14, %c0_15], %31 {strides = array<i32>} : memref<16x32xf32, #tpu.memory_space<vmem>>, vector<16x32xf32>,
    return
  }
  func.func @transform_0(%arg0: i32, %arg1: i32) -> (i32, i32) {
    %c0_i32 = arith.constant 0 : i32
    %c0_i32_0 = arith.constant 0 : i32
    return %arg0, %c0_i32 : i32, i32
  }
  func.func @transform_1(%arg0: i32, %arg1: i32) -> (i32, i32) {
    %c0_i32 = arith.constant 0 : i32
    %c0_i32_0 = arith.constant 0 : i32
    %c0_i32_1 = arith.constant 0 : i32
    return %c0_i32, %c0_i32_0 : i32, i32
  }
  func.func @transform_2(%arg0: i32, %arg1: i32) -> (i32, i32) {
    %c0_i32 = arith.constant 0 : i32
    %c0_i32_0 = arith.constant 0 : i32
    %c0_i32_1 = arith.constant 0 : i32
    return %c0_i32, %c0_i32_0 : i32, i32
  }
  func.func @transform_3(%arg0: i32, %arg1: i32) -> (i32, i32) {
    %c0_i32 = arith.constant 0 : i32
    %c0_i32_0 = arith.constant 0 : i32
    return %c0_i32, %arg1 : i32, i32
  }
  func.func @transform_4(%arg0: i32, %arg1: i32) -> (i32, i32) {
    %c0_i32 = arith.constant 0 : i32
    %c0_i32_0 = arith.constant 0 : i32
    return %c0_i32, %arg1 : i32, i32
  }
  func.func @transform_5(%arg0: i32, %arg1: i32) -> (i32, i32) {
    %c0_i32 = arith.constant 0 : i32
    return %arg0, %arg1 : i32, i32
  }
}

module attributes {stable_mosaic.version = 11 : i64} {
  func.func @_attn_kernel(%arg0: i32, %arg1: i32, %arg2: memref<1x8x32xf32, #tpu.memory_space<vmem>>, %arg3: memref<1x8x32xf32, #tpu.memory_space<vmem>>, %arg4: memref<1x8x32xf32, #tpu.memory_space<vmem>>, %arg5: memref<1x8x32xf32, #tpu.memory_space<vmem>>) attributes {dimension_semantics = [#tpu.dimension_semantics<parallel>, #tpu.dimension_semantics<parallel>], iteration_bounds = array<i64: 2, 1>, scalar_prefetch = 0 : i64, scratch_operands = 0 : i64, tpu.core_type = #tpu.core_type<tc>, window_params = [{transform_indices = @transform_0, window_bounds = array<i64: 1, 8, 32>}, {transform_indices = @transform_1, window_bounds = array<i64: 1, 8, 32>}, {transform_indices = @transform_2, window_bounds = array<i64: 1, 8, 32>}, {transform_indices = @transform_3, window_bounds = array<i64: 1, 8, 32>}]} {
    %c0 = arith.constant 0 : index
    %c0_0 = arith.constant 0 : index
    %c0_1 = arith.constant 0 : index
    %0 = vector.load %arg2[%c0, %c0_0, %c0_1] : memref<1x8x32xf32, #tpu.memory_space<vmem>>, vector<1x8x32xf32>
    %1 = vector.shape_cast %0 : vector<1x8x32xf32> to vector<8x32xf32>
    %c0_2 = arith.constant 0 : index
    %c0_3 = arith.constant 0 : index
    %c0_4 = arith.constant 0 : index
    %2 = vector.load %arg3[%c0_2, %c0_3, %c0_4] : memref<1x8x32xf32, #tpu.memory_space<vmem>>, vector<1x8x32xf32>
    %3 = vector.shape_cast %2 : vector<1x8x32xf32> to vector<8x32xf32>
    %c0_5 = arith.constant 0 : index
    %c0_6 = arith.constant 0 : index
    %c0_7 = arith.constant 0 : index
    %4 = vector.load %arg4[%c0_5, %c0_6, %c0_7] : memref<1x8x32xf32, #tpu.memory_space<vmem>>, vector<1x8x32xf32>
    %5 = vector.shape_cast %4 : vector<1x8x32xf32> to vector<8x32xf32>
    %6 = tpu.iota {dimensions = array<i32: 0>} : vector<8x8xi32>
    %7 = tpu.iota {dimensions = array<i32: 1>} : vector<8x8xi32>
    %8 = arith.cmpi sge, %6, %7 : vector<8x8xi32>
    %9 = vector.extract_strided_slice %1 {offsets = [0, 0], sizes = [8, 8], strides = [1, 1]} : vector<8x32xf32> to vector<8x8xf32>
    %cst = arith.constant 0.353553385 : f32
    %10 = vector.broadcast %cst : f32 to vector<8x8xf32>
    %11 = arith.mulf %9, %10 : vector<8x8xf32>
    %12 = arith.truncf %11 : vector<8x8xf32> to vector<8x8xbf16>
    %13 = vector.extract_strided_slice %3 {offsets = [0, 0], sizes = [8, 8], strides = [1, 1]} : vector<8x32xf32> to vector<8x8xf32>
    %14 = arith.truncf %13 : vector<8x8xf32> to vector<8x8xbf16>
    %15 = vector.extract_strided_slice %5 {offsets = [0, 0], sizes = [8, 8], strides = [1, 1]} : vector<8x32xf32> to vector<8x8xf32>
    %16 = arith.truncf %15 : vector<8x8xf32> to vector<8x8xbf16>
    %cst_8 = arith.constant dense<0.000000e+00> : vector<8x8xf32>
    %17 = tpu.matmul %12, %14, %cst_8 {dimension_numbers = #tpu.dot_dimension_numbers<[1], [1], [0], [0], [0, 0, 1, 0], [], []>} : vector<8x8xbf16>, vector<8x8xbf16>, vector<8x8xf32> -> vector<8x8xf32>
    %cst_9 = arith.constant -1.000000e+30 : f32
    %18 = vector.broadcast %cst_9 : f32 to vector<8x8xf32>
    %19 = arith.select %8, %17, %18 : vector<8x8xi1>, vector<8x8xf32>
    %cst_10 = arith.constant dense<0xFF800000> : vector<8xf32>
    %20 = vector.multi_reduction <maximumf>, %19, %cst_10 [1] : vector<8x8xf32> to vector<8xf32>
    %21 = vector.shape_cast %20 : vector<8xf32> to vector<8x1xf32>
    %22 = vector.broadcast %21 : vector<8x1xf32> to vector<8x8xf32>
    %23 = arith.subf %19, %22 : vector<8x8xf32>
    %24 = math.exp %23 : vector<8x8xf32>
    %cst_11 = arith.constant dense<0.000000e+00> : vector<8xf32>
    %25 = vector.multi_reduction <add>, %24, %cst_11 [1] : vector<8x8xf32> to vector<8xf32>
    %26 = vector.shape_cast %25 : vector<8xf32> to vector<8x1xf32>
    %27 = tpu.reciprocal %26 {approx = true} : vector<8x1xf32> -> vector<8x1xf32>
    %28 = vector.broadcast %27 : vector<8x1xf32> to vector<8x8xf32>
    %29 = arith.mulf %24, %28 : vector<8x8xf32>
    %30 = arith.truncf %29 : vector<8x8xf32> to vector<8x8xbf16>
    %cst_12 = arith.constant dense<0.000000e+00> : vector<8x8xf32>
    %31 = tpu.matmul %30, %16, %cst_12 {dimension_numbers = #tpu.dot_dimension_numbers<[1], [0], [0], [1], [0, 0, 1, 1], [], []>} : vector<8x8xbf16>, vector<8x8xbf16>, vector<8x8xf32> -> vector<8x8xf32>
    %32 = vector.extract_strided_slice %1 {offsets = [0, 8], sizes = [8, 8], strides = [1, 1]} : vector<8x32xf32> to vector<8x8xf32>
    %cst_13 = arith.constant 0.353553385 : f32
    %33 = vector.broadcast %cst_13 : f32 to vector<8x8xf32>
    %34 = arith.mulf %32, %33 : vector<8x8xf32>
    %35 = arith.truncf %34 : vector<8x8xf32> to vector<8x8xbf16>
    %36 = vector.extract_strided_slice %3 {offsets = [0, 8], sizes = [8, 8], strides = [1, 1]} : vector<8x32xf32> to vector<8x8xf32>
    %37 = arith.truncf %36 : vector<8x8xf32> to vector<8x8xbf16>
    %38 = vector.extract_strided_slice %5 {offsets = [0, 8], sizes = [8, 8], strides = [1, 1]} : vector<8x32xf32> to vector<8x8xf32>
    %39 = arith.truncf %38 : vector<8x8xf32> to vector<8x8xbf16>
    %cst_14 = arith.constant dense<0.000000e+00> : vector<8x8xf32>
    %40 = tpu.matmul %35, %37, %cst_14 {dimension_numbers = #tpu.dot_dimension_numbers<[1], [1], [0], [0], [0, 0, 1, 0], [], []>} : vector<8x8xbf16>, vector<8x8xbf16>, vector<8x8xf32> -> vector<8x8xf32>
    %cst_15 = arith.constant -1.000000e+30 : f32
    %41 = vector.broadcast %cst_15 : f32 to vector<8x8xf32>
    %42 = arith.select %8, %40, %41 : vector<8x8xi1>, vector<8x8xf32>
    %cst_16 = arith.constant dense<0xFF800000> : vector<8xf32>
    %43 = vector.multi_reduction <maximumf>, %42, %cst_16 [1] : vector<8x8xf32> to vector<8xf32>
    %44 = vector.shape_cast %43 : vector<8xf32> to vector<8x1xf32>
    %45 = vector.broadcast %44 : vector<8x1xf32> to vector<8x8xf32>
    %46 = arith.subf %42, %45 : vector<8x8xf32>
    %47 = math.exp %46 : vector<8x8xf32>
    %cst_17 = arith.constant dense<0.000000e+00> : vector<8xf32>
    %48 = vector.multi_reduction <add>, %47, %cst_17 [1] : vector<8x8xf32> to vector<8xf32>
    %49 = vector.shape_cast %48 : vector<8xf32> to vector<8x1xf32>
    %50 = tpu.reciprocal %49 {approx = true} : vector<8x1xf32> -> vector<8x1xf32>
    %51 = vector.broadcast %50 : vector<8x1xf32> to vector<8x8xf32>
    %52 = arith.mulf %47, %51 : vector<8x8xf32>
    %53 = arith.truncf %52 : vector<8x8xf32> to vector<8x8xbf16>
    %cst_18 = arith.constant dense<0.000000e+00> : vector<8x8xf32>
    %54 = tpu.matmul %53, %39, %cst_18 {dimension_numbers = #tpu.dot_dimension_numbers<[1], [0], [0], [1], [0, 0, 1, 1], [], []>} : vector<8x8xbf16>, vector<8x8xbf16>, vector<8x8xf32> -> vector<8x8xf32>
    %55 = vector.extract_strided_slice %1 {offsets = [0, 16], sizes = [8, 8], strides = [1, 1]} : vector<8x32xf32> to vector<8x8xf32>
    %cst_19 = arith.constant 0.353553385 : f32
    %56 = vector.broadcast %cst_19 : f32 to vector<8x8xf32>
    %57 = arith.mulf %55, %56 : vector<8x8xf32>
    %58 = arith.truncf %57 : vector<8x8xf32> to vector<8x8xbf16>
    %59 = vector.extract_strided_slice %3 {offsets = [0, 16], sizes = [8, 8], strides = [1, 1]} : vector<8x32xf32> to vector<8x8xf32>
    %60 = arith.truncf %59 : vector<8x8xf32> to vector<8x8xbf16>
    %61 = vector.extract_strided_slice %5 {offsets = [0, 16], sizes = [8, 8], strides = [1, 1]} : vector<8x32xf32> to vector<8x8xf32>
    %62 = arith.truncf %61 : vector<8x8xf32> to vector<8x8xbf16>
    %cst_20 = arith.constant dense<0.000000e+00> : vector<8x8xf32>
    %63 = tpu.matmul %58, %60, %cst_20 {dimension_numbers = #tpu.dot_dimension_numbers<[1], [1], [0], [0], [0, 0, 1, 0], [], []>} : vector<8x8xbf16>, vector<8x8xbf16>, vector<8x8xf32> -> vector<8x8xf32>
    %cst_21 = arith.constant -1.000000e+30 : f32
    %64 = vector.broadcast %cst_21 : f32 to vector<8x8xf32>
    %65 = arith.select %8, %63, %64 : vector<8x8xi1>, vector<8x8xf32>
    %cst_22 = arith.constant dense<0xFF800000> : vector<8xf32>
    %66 = vector.multi_reduction <maximumf>, %65, %cst_22 [1] : vector<8x8xf32> to vector<8xf32>
    %67 = vector.shape_cast %66 : vector<8xf32> to vector<8x1xf32>
    %68 = vector.broadcast %67 : vector<8x1xf32> to vector<8x8xf32>
    %69 = arith.subf %65, %68 : vector<8x8xf32>
    %70 = math.exp %69 : vector<8x8xf32>
    %cst_23 = arith.constant dense<0.000000e+00> : vector<8xf32>
    %71 = vector.multi_reduction <add>, %70, %cst_23 [1] : vector<8x8xf32> to vector<8xf32>
    %72 = vector.shape_cast %71 : vector<8xf32> to vector<8x1xf32>
    %73 = tpu.reciprocal %72 {approx = true} : vector<8x1xf32> -> vector<8x1xf32>
    %74 = vector.broadcast %73 : vector<8x1xf32> to vector<8x8xf32>
    %75 = arith.mulf %70, %74 : vector<8x8xf32>
    %76 = arith.truncf %75 : vector<8x8xf32> to vector<8x8xbf16>
    %cst_24 = arith.constant dense<0.000000e+00> : vector<8x8xf32>
    %77 = tpu.matmul %76, %62, %cst_24 {dimension_numbers = #tpu.dot_dimension_numbers<[1], [0], [0], [1], [0, 0, 1, 1], [], []>} : vector<8x8xbf16>, vector<8x8xbf16>, vector<8x8xf32> -> vector<8x8xf32>
    %78 = vector.extract_strided_slice %1 {offsets = [0, 24], sizes = [8, 8], strides = [1, 1]} : vector<8x32xf32> to vector<8x8xf32>
    %cst_25 = arith.constant 0.353553385 : f32
    %79 = vector.broadcast %cst_25 : f32 to vector<8x8xf32>
    %80 = arith.mulf %78, %79 : vector<8x8xf32>
    %81 = arith.truncf %80 : vector<8x8xf32> to vector<8x8xbf16>
    %82 = vector.extract_strided_slice %3 {offsets = [0, 24], sizes = [8, 8], strides = [1, 1]} : vector<8x32xf32> to vector<8x8xf32>
    %83 = arith.truncf %82 : vector<8x8xf32> to vector<8x8xbf16>
    %84 = vector.extract_strided_slice %5 {offsets = [0, 24], sizes = [8, 8], strides = [1, 1]} : vector<8x32xf32> to vector<8x8xf32>
    %85 = arith.truncf %84 : vector<8x8xf32> to vector<8x8xbf16>
    %cst_26 = arith.constant dense<0.000000e+00> : vector<8x8xf32>
    %86 = tpu.matmul %81, %83, %cst_26 {dimension_numbers = #tpu.dot_dimension_numbers<[1], [1], [0], [0], [0, 0, 1, 0], [], []>} : vector<8x8xbf16>, vector<8x8xbf16>, vector<8x8xf32> -> vector<8x8xf32>
    %cst_27 = arith.constant -1.000000e+30 : f32
    %87 = vector.broadcast %cst_27 : f32 to vector<8x8xf32>
    %88 = arith.select %8, %86, %87 : vector<8x8xi1>, vector<8x8xf32>
    %cst_28 = arith.constant dense<0xFF800000> : vector<8xf32>
    %89 = vector.multi_reduction <maximumf>, %88, %cst_28 [1] : vector<8x8xf32> to vector<8xf32>
    %90 = vector.shape_cast %89 : vector<8xf32> to vector<8x1xf32>
    %91 = vector.broadcast %90 : vector<8x1xf32> to vector<8x8xf32>
    %92 = arith.subf %88, %91 : vector<8x8xf32>
    %93 = math.exp %92 : vector<8x8xf32>
    %cst_29 = arith.constant dense<0.000000e+00> : vector<8xf32>
    %94 = vector.multi_reduction <add>, %93, %cst_29 [1] : vector<8x8xf32> to vector<8xf32>
    %95 = vector.shape_cast %94 : vector<8xf32> to vector<8x1xf32>
    %96 = tpu.reciprocal %95 {approx = true} : vector<8x1xf32> -> vector<8x1xf32>
    %97 = vector.broadcast %96 : vector<8x1xf32> to vector<8x8xf32>
    %98 = arith.mulf %93, %97 : vector<8x8xf32>
    %99 = arith.truncf %98 : vector<8x8xf32> to vector<8x8xbf16>
    %cst_30 = arith.constant dense<0.000000e+00> : vector<8x8xf32>
    %100 = tpu.matmul %99, %85, %cst_30 {dimension_numbers = #tpu.dot_dimension_numbers<[1], [0], [0], [1], [0, 0, 1, 1], [], []>} : vector<8x8xbf16>, vector<8x8xbf16>, vector<8x8xf32> -> vector<8x8xf32>
    %101 = tpu.concatenate %31, %54, %77, %100 in 1 : vector<8x8xf32>, vector<8x8xf32>, vector<8x8xf32>, vector<8x8xf32> -> vector<8x32xf32>
    %c0_31 = arith.constant 0 : index
    %c0_32 = arith.constant 0 : index
    %c0_33 = arith.constant 0 : index
    %102 = vector.load %arg5[%c0_31, %c0_32, %c0_33] : memref<1x8x32xf32, #tpu.memory_space<vmem>>, vector<1x8x32xf32>
    %103 = vector.shape_cast %102 : vector<1x8x32xf32> to vector<8x32xf32>
    %104 = vector.shape_cast %101 : vector<8x32xf32> to vector<1x8x32xf32>
    tpu.vector_store %arg5[%c0_31, %c0_32, %c0_33], %104 {strides = array<i32>} : memref<1x8x32xf32, #tpu.memory_space<vmem>>, vector<1x8x32xf32>,
    return
  }
  func.func @transform_0(%arg0: i32, %arg1: i32) -> (i32, i32, i32) {
    %c0_i32 = arith.constant 0 : i32
    %c0_i32_0 = arith.constant 0 : i32
    return %arg0, %c0_i32, %arg1 : i32, i32, i32
  }
  func.func @transform_1(%arg0: i32, %arg1: i32) -> (i32, i32, i32) {
    %c0_i32 = arith.constant 0 : i32
    %c0_i32_0 = arith.constant 0 : i32
    return %arg0, %c0_i32, %arg1 : i32, i32, i32
  }
  func.func @transform_2(%arg0: i32, %arg1: i32) -> (i32, i32, i32) {
    %c0_i32 = arith.constant 0 : i32
    %c0_i32_0 = arith.constant 0 : i32
    return %arg0, %c0_i32, %arg1 : i32, i32, i32
  }
  func.func @transform_3(%arg0: i32, %arg1: i32) -> (i32, i32, i32) {
    %c0_i32 = arith.constant 0 : i32
    %c0_i32_0 = arith.constant 0 : i32
    return %arg0, %c0_i32, %arg1 : i32, i32, i32
  }
}

module attributes {stable_mosaic.version = 11 : i64} {
  func.func @_dense_acc_kernel(%arg0: i32, %arg1: i32, %arg2: i32, %arg3: memref<16x32xf32, #tpu.memory_space<vmem>>, %arg4: memref<32x32xf32, #tpu.memory_space<vmem>>, %arg5: memref<1x32xf32, #tpu.memory_space<vmem>>, %arg6: memref<16x32xf32, #tpu.memory_space<vmem>>, %arg7: memref<16x32xf32, #tpu.memory_space<vmem>>, %arg8: memref<16x32xf32, #tpu.memory_space<vmem>>) attributes {dimension_semantics = [#tpu.dimension_semantics<parallel>, #tpu.dimension_semantics<parallel>, #tpu.dimension_semantics<arbitrary>], iteration_bounds = array<i64: 1, 1, 1>, scalar_prefetch = 0 : i64, scratch_operands = 1 : i64, tpu.core_type = #tpu.core_type<tc>, window_params = [{transform_indices = @transform_0, window_bounds = array<i64: 16, 32>}, {transform_indices = @transform_1, window_bounds = array<i64: 32, 32>}, {transform_indices = @transform_2, window_bounds = array<i64: 1, 32>}, {transform_indices = @transform_3, window_bounds = array<i64: 16, 32>}, {transform_indices = @transform_4, window_bounds = array<i64: 16, 32>}]} {
    %c0_i32 = arith.constant 0 : i32
    %0 = arith.cmpi eq, %arg2, %c0_i32 : i32
    %1 = arith.extui %0 : i1 to i32
    %c0_i32_0 = arith.constant 0 : i32
    %2 = arith.cmpi ne, %1, %c0_i32_0 : i32
    scf.if %2 {
      %cst_10 = arith.constant 0.000000e+00 : f32
      %14 = vector.broadcast %cst_10 : f32 to vector<16x32xf32>
      %c0_11 = arith.constant 0 : index
      %c0_12 = arith.constant 0 : index
      %15 = vector.load %arg8[%c0_11, %c0_12] : memref<16x32xf32, #tpu.memory_space<vmem>>, vector<16x32xf32>
      tpu.vector_store %arg8[%c0_11, %c0_12], %14 {strides = array<i32>} : memref<16x32xf32, #tpu.memory_space<vmem>>, vector<16x32xf32>,
    } else {
    }
    %c0 = arith.constant 0 : index
    %c0_1 = arith.constant 0 : index
    %3 = vector.load %arg8[%c0, %c0_1] : memref<16x32xf32, #tpu.memory_space<vmem>>, vector<16x32xf32>
    %c0_2 = arith.constant 0 : index
    %c0_3 = arith.constant 0 : index
    %4 = vector.load %arg3[%c0_2, %c0_3] : memref<16x32xf32, #tpu.memory_space<vmem>>, vector<16x32xf32>
    %5 = arith.truncf %4 : vector<16x32xf32> to vector<16x32xbf16>
    %c0_4 = arith.constant 0 : index
    %c0_5 = arith.constant 0 : index
    %6 = vector.load %arg4[%c0_4, %c0_5] : memref<32x32xf32, #tpu.memory_space<vmem>>, vector<32x32xf32>
    %7 = arith.truncf %6 : vector<32x32xf32> to vector<32x32xbf16>
    %cst = arith.constant dense<0.000000e+00> : vector<16x32xf32>
    %8 = tpu.matmul %5, %7, %cst {dimension_numbers = #tpu.dot_dimension_numbers<[1], [0], [0], [1], [0, 0, 1, 1], [], []>} : vector<16x32xbf16>, vector<32x32xbf16>, vector<16x32xf32> -> vector<16x32xf32>
    %9 = arith.addf %3, %8 : vector<16x32xf32>
    %c0_6 = arith.constant 0 : index
    %c0_7 = arith.constant 0 : index
    %10 = vector.load %arg8[%c0_6, %c0_7] : memref<16x32xf32, #tpu.memory_space<vmem>>, vector<16x32xf32>
    tpu.vector_store %arg8[%c0_6, %c0_7], %9 {strides = array<i32>} : memref<16x32xf32, #tpu.memory_space<vmem>>, vector<16x32xf32>,
    %c0_i32_8 = arith.constant 0 : i32
    %11 = arith.cmpi eq, %arg2, %c0_i32_8 : i32
    %12 = arith.extui %11 : i1 to i32
    %c0_i32_9 = arith.constant 0 : i32
    %13 = arith.cmpi ne, %12, %c0_i32_9 : i32
    scf.if %13 {
      %c0_10 = arith.constant 0 : index
      %c0_11 = arith.constant 0 : index
      %14 = vector.load %arg8[%c0_10, %c0_11] : memref<16x32xf32, #tpu.memory_space<vmem>>, vector<16x32xf32>
      %c0_12 = arith.constant 0 : index
      %c0_13 = arith.constant 0 : index
      %15 = vector.load %arg5[%c0_12, %c0_13] : memref<1x32xf32, #tpu.memory_space<vmem>>, vector<1x32xf32>
      %16 = vector.broadcast %15 : vector<1x32xf32> to vector<16x32xf32>
      %17 = arith.addf %14, %16 : vector<16x32xf32>
      %c0_14 = arith.constant 0 : index
      %c0_15 = arith.constant 0 : index
      %18 = vector.load %arg6[%c0_14, %c0_15] : memref<16x32xf32, #tpu.memory_space<vmem>>, vector<16x32xf32>
      %19 = arith.addf %17, %18 : vector<16x32xf32>
      %c0_16 = arith.constant 0 : index
      %c0_17 = arith.constant 0 : index
      %20 = vector.load %arg7[%c0_16, %c0_17] : memref<16x32xf32, #tpu.memory_space<vmem>>, vector<16x32xf32>
      tpu.vector_store %arg7[%c0_16, %c0_17], %19 {strides = array<i32>} : memref<16x32xf32, #tpu.memory_space<vmem>>, vector<16x32xf32>,
    } else {
    }
    return
  }
  func.func @transform_0(%arg0: i32, %arg1: i32, %arg2: i32) -> (i32, i32) {
    %c0_i32 = arith.constant 0 : i32
    return %arg0, %arg2 : i32, i32
  }
  func.func @transform_1(%arg0: i32, %arg1: i32, %arg2: i32) -> (i32, i32) {
    %c0_i32 = arith.constant 0 : i32
    return %arg2, %arg1 : i32, i32
  }
  func.func @transform_2(%arg0: i32, %arg1: i32, %arg2: i32) -> (i32, i32) {
    %c0_i32 = arith.constant 0 : i32
    %c0_i32_0 = arith.constant 0 : i32
    return %c0_i32, %arg1 : i32, i32
  }
  func.func @transform_3(%arg0: i32, %arg1: i32, %arg2: i32) -> (i32, i32) {
    %c1_i32 = arith.constant 1 : i32
    %c0_i32 = arith.constant 0 : i32
    %0 = arith.cmpi eq, %c1_i32, %c0_i32 : i32
    %c1_i32_0 = arith.constant 1 : i32
    %1 = arith.select %0, %c1_i32_0, %c1_i32 : i32
    %2 = arith.remsi %arg0, %1 : i32
    %c0_i32_1 = arith.constant 0 : i32
    %3 = arith.cmpi ne, %2, %c0_i32_1 : i32
    %c0_i32_2 = arith.constant 0 : i32
    %4 = arith.cmpi slt, %2, %c0_i32_2 : i32
    %c0_i32_3 = arith.constant 0 : i32
    %5 = arith.cmpi slt, %1, %c0_i32_3 : i32
    %6 = arith.xori %4, %5 : i1
    %7 = arith.andi %6, %3 : i1
    %8 = arith.addi %2, %1 : i32
    %9 = arith.select %7, %8, %2 : i32
    %c0_i32_4 = arith.constant 0 : i32
    return %9, %arg1 : i32, i32
  }
  func.func @transform_4(%arg0: i32, %arg1: i32, %arg2: i32) -> (i32, i32) {
    %c0_i32 = arith.constant 0 : i32
    return %arg0, %arg1 : i32, i32
  }
}

module attributes {stable_mosaic.version = 11 : i64} {
  func.func @_ln_dense_kernel(%arg0: i32, %arg1: i32, %arg2: memref<16x32xf32, #tpu.memory_space<vmem>>, %arg3: memref<1x32xf32, #tpu.memory_space<vmem>>, %arg4: memref<1x32xf32, #tpu.memory_space<vmem>>, %arg5: memref<32x128xf32, #tpu.memory_space<vmem>>, %arg6: memref<1x128xf32, #tpu.memory_space<vmem>>, %arg7: memref<16x128xf32, #tpu.memory_space<vmem>>) attributes {dimension_semantics = [#tpu.dimension_semantics<parallel>, #tpu.dimension_semantics<parallel>], iteration_bounds = array<i64: 1, 1>, scalar_prefetch = 0 : i64, scratch_operands = 0 : i64, tpu.core_type = #tpu.core_type<tc>, window_params = [{transform_indices = @transform_0, window_bounds = array<i64: 16, 32>}, {pipeline_mode = #tpu.pipeline_mode<synchronous>, transform_indices = @transform_1, window_bounds = array<i64: 1, 32>}, {pipeline_mode = #tpu.pipeline_mode<synchronous>, transform_indices = @transform_2, window_bounds = array<i64: 1, 32>}, {transform_indices = @transform_3, window_bounds = array<i64: 32, 128>}, {transform_indices = @transform_4, window_bounds = array<i64: 1, 128>}, {transform_indices = @transform_5, window_bounds = array<i64: 16, 128>}]} {
    %c0 = arith.constant 0 : index
    %c0_0 = arith.constant 0 : index
    %0 = vector.load %arg2[%c0, %c0_0] : memref<16x32xf32, #tpu.memory_space<vmem>>, vector<16x32xf32>
    %cst = arith.constant dense<0.000000e+00> : vector<16xf32>
    %1 = vector.multi_reduction <add>, %0, %cst [1] : vector<16x32xf32> to vector<16xf32>
    %2 = vector.shape_cast %1 : vector<16xf32> to vector<16x1xf32>
    %cst_1 = arith.constant 3.200000e+01 : f32
    %3 = vector.broadcast %cst_1 : f32 to vector<16x1xf32>
    %4 = arith.divf %2, %3 : vector<16x1xf32>
    %5 = vector.broadcast %4 : vector<16x1xf32> to vector<16x32xf32>
    %6 = arith.subf %0, %5 : vector<16x32xf32>
    %7 = arith.mulf %6, %6 : vector<16x32xf32>
    %cst_2 = arith.constant dense<0.000000e+00> : vector<16xf32>
    %8 = vector.multi_reduction <add>, %7, %cst_2 [1] : vector<16x32xf32> to vector<16xf32>
    %9 = vector.shape_cast %8 : vector<16xf32> to vector<16x1xf32>
    %cst_3 = arith.constant 3.200000e+01 : f32
    %10 = vector.broadcast %cst_3 : f32 to vector<16x1xf32>
    %11 = arith.divf %9, %10 : vector<16x1xf32>
    %12 = vector.broadcast %4 : vector<16x1xf32> to vector<16x32xf32>
    %13 = arith.subf %0, %12 : vector<16x32xf32>
    %cst_4 = arith.constant 9.99999974E-6 : f32
    %14 = vector.broadcast %cst_4 : f32 to vector<16x1xf32>
    %15 = arith.addf %11, %14 : vector<16x1xf32>
    %16 = math.rsqrt %15 : vector<16x1xf32>
    %17 = vector.broadcast %16 : vector<16x1xf32> to vector<16x32xf32>
    %18 = arith.mulf %13, %17 : vector<16x32xf32>
    %c0_5 = arith.constant 0 : index
    %c0_6 = arith.constant 0 : index
    %19 = vector.load %arg3[%c0_5, %c0_6] : memref<1x32xf32, #tpu.memory_space<vmem>>, vector<1x32xf32>
    %20 = vector.broadcast %19 : vector<1x32xf32> to vector<16x32xf32>
    %21 = arith.mulf %18, %20 : vector<16x32xf32>
    %c0_7 = arith.constant 0 : index
    %c0_8 = arith.constant 0 : index
    %22 = vector.load %arg4[%c0_7, %c0_8] : memref<1x32xf32, #tpu.memory_space<vmem>>, vector<1x32xf32>
    %23 = vector.broadcast %22 : vector<1x32xf32> to vector<16x32xf32>
    %24 = arith.addf %21, %23 : vector<16x32xf32>
    %25 = arith.truncf %24 : vector<16x32xf32> to vector<16x32xbf16>
    %c0_9 = arith.constant 0 : index
    %c0_10 = arith.constant 0 : index
    %26 = vector.load %arg5[%c0_9, %c0_10] : memref<32x128xf32, #tpu.memory_space<vmem>>, vector<32x128xf32>
    %27 = arith.truncf %26 : vector<32x128xf32> to vector<32x128xbf16>
    %cst_11 = arith.constant dense<0.000000e+00> : vector<16x128xf32>
    %28 = tpu.matmul %25, %27, %cst_11 {dimension_numbers = #tpu.dot_dimension_numbers<[1], [0], [0], [1], [0, 0, 1, 1], [], []>} : vector<16x32xbf16>, vector<32x128xbf16>, vector<16x128xf32> -> vector<16x128xf32>
    %c0_12 = arith.constant 0 : index
    %c0_13 = arith.constant 0 : index
    %29 = vector.load %arg6[%c0_12, %c0_13] : memref<1x128xf32, #tpu.memory_space<vmem>>, vector<1x128xf32>
    %30 = vector.broadcast %29 : vector<1x128xf32> to vector<16x128xf32>
    %31 = arith.addf %28, %30 : vector<16x128xf32>
    %cst_14 = arith.constant 5.000000e-01 : f32
    %32 = vector.broadcast %cst_14 : f32 to vector<16x128xf32>
    %33 = arith.mulf %32, %31 : vector<16x128xf32>
    %cst_15 = arith.constant 0.636619746 : f32
    %34 = math.sqrt %cst_15 : f32
    %cst_16 = arith.constant 4.471500e-02 : f32
    %35 = vector.broadcast %cst_16 : f32 to vector<16x128xf32>
    %36 = arith.mulf %35, %31 : vector<16x128xf32>
    %37 = arith.mulf %36, %31 : vector<16x128xf32>
    %38 = arith.mulf %37, %31 : vector<16x128xf32>
    %39 = arith.addf %31, %38 : vector<16x128xf32>
    %40 = vector.broadcast %34 : f32 to vector<16x128xf32>
    %41 = arith.mulf %40, %39 : vector<16x128xf32>
    %42 = math.tanh %41 : vector<16x128xf32>
    %cst_17 = arith.constant 1.000000e+00 : f32
    %43 = vector.broadcast %cst_17 : f32 to vector<16x128xf32>
    %44 = arith.addf %43, %42 : vector<16x128xf32>
    %45 = arith.mulf %33, %44 : vector<16x128xf32>
    %c0_18 = arith.constant 0 : index
    %c0_19 = arith.constant 0 : index
    %46 = vector.load %arg7[%c0_18, %c0_19] : memref<16x128xf32, #tpu.memory_space<vmem>>, vector<16x128xf32>
    tpu.vector_store %arg7[%c0_18, %c0_19], %45 {strides = array<i32>} : memref<16x128xf32, #tpu.memory_space<vmem>>, vector<16x128xf32>,
    return
  }
  func.func @transform_0(%arg0: i32, %arg1: i32) -> (i32, i32) {
    %c0_i32 = arith.constant 0 : i32
    %c0_i32_0 = arith.constant 0 : i32
    return %arg0, %c0_i32 : i32, i32
  }
  func.func @transform_1(%arg0: i32, %arg1: i32) -> (i32, i32) {
    %c0_i32 = arith.constant 0 : i32
    %c0_i32_0 = arith.constant 0 : i32
    %c0_i32_1 = arith.constant 0 : i32
    return %c0_i32, %c0_i32_0 : i32, i32
  }
  func.func @transform_2(%arg0: i32, %arg1: i32) -> (i32, i32) {
    %c0_i32 = arith.constant 0 : i32
    %c0_i32_0 = arith.constant 0 : i32
    %c0_i32_1 = arith.constant 0 : i32
    return %c0_i32, %c0_i32_0 : i32, i32
  }
  func.func @transform_3(%arg0: i32, %arg1: i32) -> (i32, i32) {
    %c0_i32 = arith.constant 0 : i32
    %c0_i32_0 = arith.constant 0 : i32
    return %c0_i32, %arg1 : i32, i32
  }
  func.func @transform_4(%arg0: i32, %arg1: i32) -> (i32, i32) {
    %c0_i32 = arith.constant 0 : i32
    %c0_i32_0 = arith.constant 0 : i32
    return %c0_i32, %arg1 : i32, i32
  }
  func.func @transform_5(%arg0: i32, %arg1: i32) -> (i32, i32) {
    %c0_i32 = arith.constant 0 : i32
    return %arg0, %arg1 : i32, i32
  }
}

module attributes {stable_mosaic.version = 11 : i64} {
  func.func @_layernorm_kernel(%arg0: i32, %arg1: memref<16x32xf32, #tpu.memory_space<vmem>>, %arg2: memref<1x32xf32, #tpu.memory_space<vmem>>, %arg3: memref<1x32xf32, #tpu.memory_space<vmem>>, %arg4: memref<16x32xf32, #tpu.memory_space<vmem>>) attributes {dimension_semantics = [#tpu.dimension_semantics<parallel>], iteration_bounds = array<i64: 1>, scalar_prefetch = 0 : i64, scratch_operands = 0 : i64, tpu.core_type = #tpu.core_type<tc>, window_params = [{transform_indices = @transform_0, window_bounds = array<i64: 16, 32>}, {pipeline_mode = #tpu.pipeline_mode<synchronous>, transform_indices = @transform_1, window_bounds = array<i64: 1, 32>}, {pipeline_mode = #tpu.pipeline_mode<synchronous>, transform_indices = @transform_2, window_bounds = array<i64: 1, 32>}, {transform_indices = @transform_3, window_bounds = array<i64: 16, 32>}]} {
    %c0 = arith.constant 0 : index
    %c0_0 = arith.constant 0 : index
    %0 = vector.load %arg1[%c0, %c0_0] : memref<16x32xf32, #tpu.memory_space<vmem>>, vector<16x32xf32>
    %cst = arith.constant dense<0.000000e+00> : vector<16xf32>
    %1 = vector.multi_reduction <add>, %0, %cst [1] : vector<16x32xf32> to vector<16xf32>
    %2 = vector.shape_cast %1 : vector<16xf32> to vector<16x1xf32>
    %cst_1 = arith.constant 3.200000e+01 : f32
    %3 = vector.broadcast %cst_1 : f32 to vector<16x1xf32>
    %4 = arith.divf %2, %3 : vector<16x1xf32>
    %5 = vector.broadcast %4 : vector<16x1xf32> to vector<16x32xf32>
    %6 = arith.subf %0, %5 : vector<16x32xf32>
    %7 = arith.mulf %6, %6 : vector<16x32xf32>
    %cst_2 = arith.constant dense<0.000000e+00> : vector<16xf32>
    %8 = vector.multi_reduction <add>, %7, %cst_2 [1] : vector<16x32xf32> to vector<16xf32>
    %9 = vector.shape_cast %8 : vector<16xf32> to vector<16x1xf32>
    %cst_3 = arith.constant 3.200000e+01 : f32
    %10 = vector.broadcast %cst_3 : f32 to vector<16x1xf32>
    %11 = arith.divf %9, %10 : vector<16x1xf32>
    %12 = vector.broadcast %4 : vector<16x1xf32> to vector<16x32xf32>
    %13 = arith.subf %0, %12 : vector<16x32xf32>
    %cst_4 = arith.constant 9.99999974E-6 : f32
    %14 = vector.broadcast %cst_4 : f32 to vector<16x1xf32>
    %15 = arith.addf %11, %14 : vector<16x1xf32>
    %16 = math.rsqrt %15 : vector<16x1xf32>
    %17 = vector.broadcast %16 : vector<16x1xf32> to vector<16x32xf32>
    %18 = arith.mulf %13, %17 : vector<16x32xf32>
    %c0_5 = arith.constant 0 : index
    %c0_6 = arith.constant 0 : index
    %19 = vector.load %arg2[%c0_5, %c0_6] : memref<1x32xf32, #tpu.memory_space<vmem>>, vector<1x32xf32>
    %20 = vector.broadcast %19 : vector<1x32xf32> to vector<16x32xf32>
    %21 = arith.mulf %18, %20 : vector<16x32xf32>
    %c0_7 = arith.constant 0 : index
    %c0_8 = arith.constant 0 : index
    %22 = vector.load %arg3[%c0_7, %c0_8] : memref<1x32xf32, #tpu.memory_space<vmem>>, vector<1x32xf32>
    %23 = vector.broadcast %22 : vector<1x32xf32> to vector<16x32xf32>
    %24 = arith.addf %21, %23 : vector<16x32xf32>
    %c0_9 = arith.constant 0 : index
    %c0_10 = arith.constant 0 : index
    %25 = vector.load %arg4[%c0_9, %c0_10] : memref<16x32xf32, #tpu.memory_space<vmem>>, vector<16x32xf32>
    tpu.vector_store %arg4[%c0_9, %c0_10], %24 {strides = array<i32>} : memref<16x32xf32, #tpu.memory_space<vmem>>, vector<16x32xf32>,
    return
  }
  func.func @transform_0(%arg0: i32) -> (i32, i32) {
    %c0_i32 = arith.constant 0 : i32
    %c0_i32_0 = arith.constant 0 : i32
    return %arg0, %c0_i32 : i32, i32
  }
  func.func @transform_1(%arg0: i32) -> (i32, i32) {
    %c0_i32 = arith.constant 0 : i32
    %c0_i32_0 = arith.constant 0 : i32
    %c0_i32_1 = arith.constant 0 : i32
    return %c0_i32, %c0_i32_0 : i32, i32
  }
  func.func @transform_2(%arg0: i32) -> (i32, i32) {
    %c0_i32 = arith.constant 0 : i32
    %c0_i32_0 = arith.constant 0 : i32
    %c0_i32_1 = arith.constant 0 : i32
    return %c0_i32, %c0_i32_0 : i32, i32
  }
  func.func @transform_3(%arg0: i32) -> (i32, i32) {
    %c0_i32 = arith.constant 0 : i32
    %c0_i32_0 = arith.constant 0 : i32
    return %arg0, %c0_i32 : i32, i32
  }
}

module attributes {stable_mosaic.version = 11 : i64} {
  func.func @_dense_acc_kernel(%arg0: i32, %arg1: i32, %arg2: i32, %arg3: memref<16x128xf32, #tpu.memory_space<vmem>>, %arg4: memref<128x32xf32, #tpu.memory_space<vmem>>, %arg5: memref<1x32xf32, #tpu.memory_space<vmem>>, %arg6: memref<16x32xf32, #tpu.memory_space<vmem>>, %arg7: memref<16x32xf32, #tpu.memory_space<vmem>>, %arg8: memref<16x32xf32, #tpu.memory_space<vmem>>) attributes {dimension_semantics = [#tpu.dimension_semantics<parallel>, #tpu.dimension_semantics<parallel>, #tpu.dimension_semantics<arbitrary>], iteration_bounds = array<i64: 1, 1, 1>, scalar_prefetch = 0 : i64, scratch_operands = 1 : i64, tpu.core_type = #tpu.core_type<tc>, window_params = [{transform_indices = @transform_0, window_bounds = array<i64: 16, 128>}, {transform_indices = @transform_1, window_bounds = array<i64: 128, 32>}, {transform_indices = @transform_2, window_bounds = array<i64: 1, 32>}, {transform_indices = @transform_3, window_bounds = array<i64: 16, 32>}, {transform_indices = @transform_4, window_bounds = array<i64: 16, 32>}]} {
    %c0_i32 = arith.constant 0 : i32
    %0 = arith.cmpi eq, %arg2, %c0_i32 : i32
    %1 = arith.extui %0 : i1 to i32
    %c0_i32_0 = arith.constant 0 : i32
    %2 = arith.cmpi ne, %1, %c0_i32_0 : i32
    scf.if %2 {
      %cst_10 = arith.constant 0.000000e+00 : f32
      %14 = vector.broadcast %cst_10 : f32 to vector<16x32xf32>
      %c0_11 = arith.constant 0 : index
      %c0_12 = arith.constant 0 : index
      %15 = vector.load %arg8[%c0_11, %c0_12] : memref<16x32xf32, #tpu.memory_space<vmem>>, vector<16x32xf32>
      tpu.vector_store %arg8[%c0_11, %c0_12], %14 {strides = array<i32>} : memref<16x32xf32, #tpu.memory_space<vmem>>, vector<16x32xf32>,
    } else {
    }
    %c0 = arith.constant 0 : index
    %c0_1 = arith.constant 0 : index
    %3 = vector.load %arg8[%c0, %c0_1] : memref<16x32xf32, #tpu.memory_space<vmem>>, vector<16x32xf32>
    %c0_2 = arith.constant 0 : index
    %c0_3 = arith.constant 0 : index
    %4 = vector.load %arg3[%c0_2, %c0_3] : memref<16x128xf32, #tpu.memory_space<vmem>>, vector<16x128xf32>
    %5 = arith.truncf %4 : vector<16x128xf32> to vector<16x128xbf16>
    %c0_4 = arith.constant 0 : index
    %c0_5 = arith.constant 0 : index
    %6 = vector.load %arg4[%c0_4, %c0_5] : memref<128x32xf32, #tpu.memory_space<vmem>>, vector<128x32xf32>
    %7 = arith.truncf %6 : vector<128x32xf32> to vector<128x32xbf16>
    %cst = arith.constant dense<0.000000e+00> : vector<16x32xf32>
    %8 = tpu.matmul %5, %7, %cst {dimension_numbers = #tpu.dot_dimension_numbers<[1], [0], [0], [1], [0, 0, 1, 1], [], []>} : vector<16x128xbf16>, vector<128x32xbf16>, vector<16x32xf32> -> vector<16x32xf32>
    %9 = arith.addf %3, %8 : vector<16x32xf32>
    %c0_6 = arith.constant 0 : index
    %c0_7 = arith.constant 0 : index
    %10 = vector.load %arg8[%c0_6, %c0_7] : memref<16x32xf32, #tpu.memory_space<vmem>>, vector<16x32xf32>
    tpu.vector_store %arg8[%c0_6, %c0_7], %9 {strides = array<i32>} : memref<16x32xf32, #tpu.memory_space<vmem>>, vector<16x32xf32>,
    %c0_i32_8 = arith.constant 0 : i32
    %11 = arith.cmpi eq, %arg2, %c0_i32_8 : i32
    %12 = arith.extui %11 : i1 to i32
    %c0_i32_9 = arith.constant 0 : i32
    %13 = arith.cmpi ne, %12, %c0_i32_9 : i32
    scf.if %13 {
      %c0_10 = arith.constant 0 : index
      %c0_11 = arith.constant 0 : index
      %14 = vector.load %arg8[%c0_10, %c0_11] : memref<16x32xf32, #tpu.memory_space<vmem>>, vector<16x32xf32>
      %c0_12 = arith.constant 0 : index
      %c0_13 = arith.constant 0 : index
      %15 = vector.load %arg5[%c0_12, %c0_13] : memref<1x32xf32, #tpu.memory_space<vmem>>, vector<1x32xf32>
      %16 = vector.broadcast %15 : vector<1x32xf32> to vector<16x32xf32>
      %17 = arith.addf %14, %16 : vector<16x32xf32>
      %c0_14 = arith.constant 0 : index
      %c0_15 = arith.constant 0 : index
      %18 = vector.load %arg6[%c0_14, %c0_15] : memref<16x32xf32, #tpu.memory_space<vmem>>, vector<16x32xf32>
      %19 = arith.addf %17, %18 : vector<16x32xf32>
      %c0_16 = arith.constant 0 : index
      %c0_17 = arith.constant 0 : index
      %20 = vector.load %arg7[%c0_16, %c0_17] : memref<16x32xf32, #tpu.memory_space<vmem>>, vector<16x32xf32>
      tpu.vector_store %arg7[%c0_16, %c0_17], %19 {strides = array<i32>} : memref<16x32xf32, #tpu.memory_space<vmem>>, vector<16x32xf32>,
    } else {
    }
    return
  }
  func.func @transform_0(%arg0: i32, %arg1: i32, %arg2: i32) -> (i32, i32) {
    %c0_i32 = arith.constant 0 : i32
    return %arg0, %arg2 : i32, i32
  }
  func.func @transform_1(%arg0: i32, %arg1: i32, %arg2: i32) -> (i32, i32) {
    %c0_i32 = arith.constant 0 : i32
    return %arg2, %arg1 : i32, i32
  }
  func.func @transform_2(%arg0: i32, %arg1: i32, %arg2: i32) -> (i32, i32) {
    %c0_i32 = arith.constant 0 : i32
    %c0_i32_0 = arith.constant 0 : i32
    return %c0_i32, %arg1 : i32, i32
  }
  func.func @transform_3(%arg0: i32, %arg1: i32, %arg2: i32) -> (i32, i32) {
    %c1_i32 = arith.constant 1 : i32
    %c0_i32 = arith.constant 0 : i32
    %0 = arith.cmpi eq, %c1_i32, %c0_i32 : i32
    %c1_i32_0 = arith.constant 1 : i32
    %1 = arith.select %0, %c1_i32_0, %c1_i32 : i32
    %2 = arith.remsi %arg0, %1 : i32
    %c0_i32_1 = arith.constant 0 : i32
    %3 = arith.cmpi ne, %2, %c0_i32_1 : i32
    %c0_i32_2 = arith.constant 0 : i32
    %4 = arith.cmpi slt, %2, %c0_i32_2 : i32
    %c0_i32_3 = arith.constant 0 : i32
    %5 = arith.cmpi slt, %1, %c0_i32_3 : i32
    %6 = arith.xori %4, %5 : i1
    %7 = arith.andi %6, %3 : i1
    %8 = arith.addi %2, %1 : i32
    %9 = arith.select %7, %8, %2 : i32
    %c0_i32_4 = arith.constant 0 : i32
    return %9, %arg1 : i32, i32
  }
  func.func @transform_4(%arg0: i32, %arg1: i32, %arg2: i32) -> (i32, i32) {
    %c0_i32 = arith.constant 0 : i32
    return %arg0, %arg1 : i32, i32
  }
}

</mosaic_0001>

<llo_original>
// kernel: proj_timeseries_gpt2_forward.19
$region0: #{proj_timeseries_gpt2_forward.19}
  #allocation0 [shape = 'u32[]', space=smem, size = 0x4, offset = 0x4, fixed_abs, tag = 'smem constant byte address 0x4 - core index']
  #allocation1 [shape = 'u32[144,128]{1,0:T(1,128)}', space=vmem, size = 0x12000, scoped, tag = 'internal scratch']
  %s0 = inlined_call_operand.vmem [shape: f32[16,32], index: 0, kind: input, shape index: {}]
  %s1 = inlined_call_operand.vmem [shape: f32[1,32], index: 1, kind: input, shape index: {}]
  %s2 = inlined_call_operand.vmem [shape: f32[1,32], index: 2, kind: input, shape index: {}]
  %s3 = inlined_call_operand.vmem [shape: f32[32,32], index: 3, kind: input, shape index: {}]
  %s4 = inlined_call_operand.vmem [shape: f32[1,32], index: 4, kind: input, shape index: {}]
  %s5 = inlined_call_operand.vmem [shape: f32[16,32], index: 5, kind: output, shape index: {}]
  %s6 = sld [smem:[#allocation0]]
  $region30: #{proj_timeseries_gpt2_forward.19} parent=0
    _
  %s8 = ssub.s32 1, %s6
  %s9 = scalar_select 0, %s8, %s6
  // Predicated region
  $region2: #{proj_timeseries_gpt2_forward.19} parent=0 // pred_check
    _
  $region3: #{proj_timeseries_gpt2_forward.19} parent=0 // pred_check_branch
    %11 = sbr.rel (0) target = $region5
  $region4: #{proj_timeseries_gpt2_forward.19} parent=0 // pred_region
    _
  $region5: #{proj_timeseries_gpt2_forward.19} parent=0 // pred_fallthru
    _
  // Predicated region
  $region6: #{proj_timeseries_gpt2_forward.19} parent=0 // pred_check
    _
  $region7: #{proj_timeseries_gpt2_forward.19} parent=0 // pred_check_branch
    %13 = sbr.rel (0) target = $region9
  $region8: #{proj_timeseries_gpt2_forward.19} parent=0 // pred_region
    _
  $region9: #{proj_timeseries_gpt2_forward.19} parent=0 // pred_fallthru
    _
  // Predicated region
  $region10: #{proj_timeseries_gpt2_forward.19} parent=0 // pred_check
    _
  $region11: #{proj_timeseries_gpt2_forward.19} parent=0 // pred_check_branch
    %15 = sbr.rel (0) target = $region13
  $region12: #{proj_timeseries_gpt2_forward.19} parent=0 // pred_region
    _
  $region13: #{proj_timeseries_gpt2_forward.19} parent=0 // pred_fallthru
    _
  // Predicated region
  $region14: #{proj_timeseries_gpt2_forward.19} parent=0 // pred_check
    _
  $region15: #{proj_timeseries_gpt2_forward.19} parent=0 // pred_check_branch
    %17 = sbr.rel (0) target = $region17
  $region16: #{proj_timeseries_gpt2_forward.19} parent=0 // pred_region
    _
  $region17: #{proj_timeseries_gpt2_forward.19} parent=0 // pred_fallthru
    _
  // Predicated region
  $region18: #{proj_timeseries_gpt2_forward.19} parent=0 // pred_check
    _
  $region19: #{proj_timeseries_gpt2_forward.19} parent=0 // pred_check_branch
    %19 = sbr.rel (0) target = $region21
  $region20: #{proj_timeseries_gpt2_forward.19} parent=0 // pred_region
    _
  $region21: #{proj_timeseries_gpt2_forward.19} parent=0 // pred_fallthru
    _
  %v21 = vld [vmem:[%s0] sm:$0xff]
  %v22 = vld [vmem:[%s0 + $0x8] sm:$0xff]
  %vm23 = vcmask 261120
  %v24 = vsel %vm23, %v21, 0.0
  %25 = vadd.xlane.f32.xlu0 %v24
  %v26 = vpop.xlane.xlu0 %25
  %v27 = vsel %vm23, %v22, 0.0
  %28 = vadd.xlane.f32.xlu0 %v27
  %v29 = vpop.xlane.xlu0 %28
  %v30 = vrcp.pop 32.0
  %v31 = vmul.f32 %v26, %v30
  %v32 = vmul.f32 %v29, %v30
  %v33 = vsub.f32 %v21, %v31
  %v34 = vsub.f32 %v22, %v32
  %v35 = vmul.f32 %v33, %v33
  %v36 = vmul.f32 %v34, %v34
  %v37 = vsel %vm23, %v35, 0.0
  %38 = vadd.xlane.f32.xlu0 %v37
  %v39 = vpop.xlane.xlu0 %38
  %v40 = vsel %vm23, %v36, 0.0
  %41 = vadd.xlane.f32.xlu0 %v40
  %v42 = vpop.xlane.xlu0 %41
  %v43 = vmul.f32 %v39, %v30
  %v44 = vmul.f32 %v42, %v30
  %v45 = vadd.f32 %v43, 1e-05
  %v46 = vadd.f32 %v44, 1e-05
  %v47 = vrsqrt.pop %v45
  %v48 = vrsqrt.pop %v46
  %v49 = vmul.f32 %v33, %v47
  %v50 = vmul.f32 %v34, %v48
  %v51 = vld [vmem:[%s1] sm:$0x1]
  %v53 = vlaneseq
  %v54 = vshrl.u32 %v53, 7
  %v55 = vsub.s32 0, %v54
  %v56 = vrot.slane %v51, %v55
  %v58 = vmul.f32 %v49, %v56
  %v59 = vmul.f32 %v50, %v56
  %v60 = vld [vmem:[%s2] sm:$0x1]
  %v62 = vlaneseq
  %v63 = vshrl.u32 %v62, 7
  %v64 = vsub.s32 0, %v63
  %v65 = vrot.slane %v60, %v64
  %v67 = vadd.f32 %v58, %v65
  %v68 = vadd.f32 %v59, %v65
  %v69 = vpack.c.bf16 %v68, %v67
  %v70 = vld [vmem:[%s3] sm:$0xff]
  %v71 = vld [vmem:[%s3 + $0x8] sm:$0xff]
  %v72 = vld [vmem:[%s3 + $0x10] sm:$0xff]
  %v73 = vld [vmem:[%s3 + $0x18] sm:$0xff]
  %v74 = vpack.c.bf16 %v71, %v70
  %v75 = vpack.c.bf16 %v73, %v72
  %v76 = vld [vmem:[%s4] sm:$0x1]
  %v78 = vlaneseq
  %v79 = vshrl.u32 %v78, 7
  %v80 = vsub.s32 0, %v79
  %v81 = vrot.slane %v76, %v80
  %v84 = vsel %vm23, %v69, 0
  %86 = vmatprep.subr.bf16.mxu0 0
  %87 = vmatpush1.bf16.msra.mxu0 %v74
  %88 = vmatprep.subr.bf16.mxu0 0
  %89 = vmatpush1.bf16.msra.mxu0 %v75
  %90 = vmatprep.subr.bf16.mxu0 0
  %91 = vmatpush1.bf16.msra.mxu0 0
  %92 = vmatprep.subr.bf16.mxu0 0
  %93 = vmatpush1.bf16.msra.mxu0 0
  %94 = vmatprep.subr.bf16.mxu0 0
  %95 = vmatpush1.bf16.msra.mxu0 0
  %96 = vmatprep.subr.bf16.mxu0 0
  %97 = vmatpush1.bf16.msra.mxu0 0
  %98 = vmatprep.subr.bf16.mxu0 0
  %99 = vmatpush1.bf16.msra.mxu0 0
  %100 = vmatprep.subr.bf16.mxu0 0
  %101 = vmatpush1.bf16.msra.mxu0 0
  %102 = vmatprep.subr.bf16.mxu0 0
  %103 = vmatpush1.bf16.msra.mxu0 0
  %104 = vmatprep.subr.bf16.mxu0 0
  %105 = vmatpush1.bf16.msra.mxu0 0
  %106 = vmatprep.subr.bf16.mxu0 0
  %107 = vmatpush1.bf16.msra.mxu0 0
  %108 = vmatprep.subr.bf16.mxu0 0
  %109 = vmatpush1.bf16.msra.mxu0 0
  %110 = vmatprep.subr.bf16.mxu0 0
  %111 = vmatpush1.bf16.msra.mxu0 0
  %112 = vmatprep.subr.bf16.mxu0 0
  %113 = vmatpush1.bf16.msra.mxu0 0
  %114 = vmatprep.subr.bf16.mxu0 0
  %115 = vmatpush1.bf16.msra.mxu0 0
  %116 = vmatprep.subr.bf16.mxu0 0
  %117 = vmatpush1.bf16.msra.mxu0 0
  %118 = vmatprep.mubr.bf16.mxu0 0
  %119 = vmatmul.mubr.bf16.gmra.mrb[0].mxu0 %v84
  %v120 = vpop.f32.mrb[0].mxu0
  %v121 = vadd.f32 %v81, %v120
  %v122 = vpop.f32.mrb[0].mxu0
  %v123 = vpop.f32.mrb[0].mxu0
  %v124 = vadd.f32 %v81, %v123
  %v125 = vpop.f32.mrb[0].mxu0
  %126 = vdwg.mxu0
  %127 = vst.msk [vmem:[%s5] sm:$0xff] %vm23, %v121
  %128 = vst.msk [vmem:[%s5 + $0x8] sm:$0xff] %vm23, %v124
  // Predicated region
  $region22: #{proj_timeseries_gpt2_forward.19} parent=0 // pred_check
    _
  $region23: #{proj_timeseries_gpt2_forward.19} parent=0 // pred_check_branch
    %130 = sbr.rel (0) target = $region25
  $region24: #{proj_timeseries_gpt2_forward.19} parent=0 // pred_region
    _
  $region25: #{proj_timeseries_gpt2_forward.19} parent=0 // pred_fallthru
    _
  // Predicated region
  $region26: #{proj_timeseries_gpt2_forward.19} parent=0 // pred_check
    _
  $region27: #{proj_timeseries_gpt2_forward.19} parent=0 // pred_check_branch
    %132 = sbr.rel (0) target = $region29
  $region28: #{proj_timeseries_gpt2_forward.19} parent=0 // pred_region
    _
  $region29: #{proj_timeseries_gpt2_forward.19} parent=0 // pred_fallthru
    _

// kernel: proj_timeseries_gpt2_forward.21
$region0: #{proj_timeseries_gpt2_forward.21}
  #allocation0 [shape = 'u32[]', space=smem, size = 0x4, offset = 0x4, fixed_abs, tag = 'smem constant byte address 0x4 - core index']
  #allocation1 [shape = 'u32[144,128]{1,0:T(1,128)}', space=vmem, size = 0x12000, scoped, tag = 'internal scratch']
  #allocation2 [shape = 'f32[16,32]{1,0:T(8,128)}', space=vmem, size = 0x2000, scoped, tag = 'scratch operand']
  %s0 = inlined_call_operand.vmem [shape: f32[16,32], index: 0, kind: input, shape index: {}]
  %s1 = inlined_call_operand.vmem [shape: f32[32,32], index: 1, kind: input, shape index: {}]
  %s2 = inlined_call_operand.vmem [shape: f32[1,32], index: 2, kind: input, shape index: {}]
  %s3 = inlined_call_operand.vmem [shape: f32[16,32], index: 3, kind: input, shape index: {}]
  %s4 = inlined_call_operand.vmem [shape: f32[16,32], index: 4, kind: output, shape index: {}]
  %s5 = sld [smem:[#allocation0]]
  $region34: #{proj_timeseries_gpt2_forward.21} parent=0
    _
  %s7 = ssub.s32 1, %s5
  %s8 = scalar_select 0, %s7, %s5
  // Predicated region
  $region2: #{proj_timeseries_gpt2_forward.21} parent=0 // pred_check
    _
  $region3: #{proj_timeseries_gpt2_forward.21} parent=0 // pred_check_branch
    %10 = sbr.rel (0) target = $region5
  $region4: #{proj_timeseries_gpt2_forward.21} parent=0 // pred_region
    _
  $region5: #{proj_timeseries_gpt2_forward.21} parent=0 // pred_fallthru
    _
  // Predicated region
  $region6: #{proj_timeseries_gpt2_forward.21} parent=0 // pred_check
    _
  $region7: #{proj_timeseries_gpt2_forward.21} parent=0 // pred_check_branch
    %12 = sbr.rel (0) target = $region9
  $region8: #{proj_timeseries_gpt2_forward.21} parent=0 // pred_region
    _
  $region9: #{proj_timeseries_gpt2_forward.21} parent=0 // pred_fallthru
    _
  // Predicated region
  $region10: #{proj_timeseries_gpt2_forward.21} parent=0 // pred_check
    _
  $region11: #{proj_timeseries_gpt2_forward.21} parent=0 // pred_check_branch
    %14 = sbr.rel (0) target = $region13
  $region12: #{proj_timeseries_gpt2_forward.21} parent=0 // pred_region
    _
  $region13: #{proj_timeseries_gpt2_forward.21} parent=0 // pred_fallthru
    _
  // Predicated region
  $region14: #{proj_timeseries_gpt2_forward.21} parent=0 // pred_check
    _
  $region15: #{proj_timeseries_gpt2_forward.21} parent=0 // pred_check_branch
    %16 = sbr.rel (0) target = $region17
  $region16: #{proj_timeseries_gpt2_forward.21} parent=0 // pred_region
    _
  $region17: #{proj_timeseries_gpt2_forward.21} parent=0 // pred_fallthru
    _
  %p18 = scmp.eq.s32.totalorder 0, 0
  // Predicated region
  $region18: #{proj_timeseries_gpt2_forward.21} parent=0 // pred_check
    %p19 = pneg %p18
  $region19: #{proj_timeseries_gpt2_forward.21} parent=0 // pred_check_branch
    %21 = sbr.rel (%p19) target = $region21
  $region20: #{proj_timeseries_gpt2_forward.21} parent=0 // pred_region
    %vm22 = vcmask 261120
    %23 = vst.msk [vmem:[#allocation2] sm:$0xff] %vm22, 0.0
    %24 = vst.msk [vmem:[#allocation2 + $0x8] sm:$0xff] %vm22, 0.0
  $region21: #{proj_timeseries_gpt2_forward.21} parent=0 // pred_fallthru
    _
  %v25 = vld [vmem:[#allocation2] sm:$0xff]
  %v26 = vld [vmem:[#allocation2 + $0x8] sm:$0xff]
  %v27 = vld [vmem:[%s0] sm:$0xff]
  %v28 = vld [vmem:[%s0 + $0x8] sm:$0xff]
  %v29 = vpack.c.bf16 %v28, %v27
  %v30 = vld [vmem:[%s1] sm:$0xff]
  %v31 = vld [vmem:[%s1 + $0x8] sm:$0xff]
  %v32 = vld [vmem:[%s1 + $0x10] sm:$0xff]
  %v33 = vld [vmem:[%s1 + $0x18] sm:$0xff]
  %v34 = vpack.c.bf16 %v31, %v30
  %v35 = vpack.c.bf16 %v33, %v32
  %vm36 = vcmask 261120
  %v38 = vsel %vm36, %v29, 0
  %40 = vmatprep.subr.bf16.mxu0 0
  %41 = vmatpush1.bf16.msra.mxu0 %v34
  %42 = vmatprep.subr.bf16.mxu0 0
  %43 = vmatpush1.bf16.msra.mxu0 %v35
  %44 = vmatprep.subr.bf16.mxu0 0
  %45 = vmatpush1.bf16.msra.mxu0 0
  %46 = vmatprep.subr.bf16.mxu0 0
  %47 = vmatpush1.bf16.msra.mxu0 0
  %48 = vmatprep.subr.bf16.mxu0 0
  %49 = vmatpush1.bf16.msra.mxu0 0
  %50 = vmatprep.subr.bf16.mxu0 0
  %51 = vmatpush1.bf16.msra.mxu0 0
  %52 = vmatprep.subr.bf16.mxu0 0
  %53 = vmatpush1.bf16.msra.mxu0 0
  %54 = vmatprep.subr.bf16.mxu0 0
  %55 = vmatpush1.bf16.msra.mxu0 0
  %56 = vmatprep.subr.bf16.mxu0 0
  %57 = vmatpush1.bf16.msra.mxu0 0
  %58 = vmatprep.subr.bf16.mxu0 0
  %59 = vmatpush1.bf16.msra.mxu0 0
  %60 = vmatprep.subr.bf16.mxu0 0
  %61 = vmatpush1.bf16.msra.mxu0 0
  %62 = vmatprep.subr.bf16.mxu0 0
  %63 = vmatpush1.bf16.msra.mxu0 0
  %64 = vmatprep.subr.bf16.mxu0 0
  %65 = vmatpush1.bf16.msra.mxu0 0
  %66 = vmatprep.subr.bf16.mxu0 0
  %67 = vmatpush1.bf16.msra.mxu0 0
  %68 = vmatprep.subr.bf16.mxu0 0
  %69 = vmatpush1.bf16.msra.mxu0 0
  %70 = vmatprep.subr.bf16.mxu0 0
  %71 = vmatpush1.bf16.msra.mxu0 0
  %72 = vmatprep.mubr.bf16.mxu0 0
  %73 = vmatmul.mubr.bf16.gmra.mrb[0].mxu0 %v38
  %v74 = vpop.f32.mrb[0].mxu0
  %v75 = vadd.f32 0.0, %v74
  %v76 = vpop.f32.mrb[0].mxu0
  %v77 = vpop.f32.mrb[0].mxu0
  %v78 = vadd.f32 0.0, %v77
  %v79 = vpop.f32.mrb[0].mxu0
  %80 = vdwg.mxu0
  %v81 = vadd.f32 %v25, %v75
  %v82 = vadd.f32 %v26, %v78
  %83 = vst.msk [vmem:[#allocation2] sm:$0xff] %vm36, %v81
  %84 = vst.msk [vmem:[#allocation2 + $0x8] sm:$0xff] %vm36, %v82
  // Predicated region
  $region22: #{proj_timeseries_gpt2_forward.21} parent=0 // pred_check
    %p85 = pneg %p18
  $region23: #{proj_timeseries_gpt2_forward.21} parent=0 // pred_check_branch
    %87 = sbr.rel (%p85) target = $region25
  $region24: #{proj_timeseries_gpt2_forward.21} parent=0 // pred_region
    %v88 = vld [vmem:[#allocation2] sm:$0xff]
    %v89 = vld [vmem:[#allocation2 + $0x8] sm:$0xff]
    %v90 = vld [vmem:[%s2] sm:$0x1]
    %v92 = vlaneseq
    %v93 = vshrl.u32 %v92, 7
    %v94 = vsub.s32 0, %v93
    %v95 = vrot.slane %v90, %v94
    %v97 = vadd.f32 %v88, %v95
    %v98 = vadd.f32 %v89, %v95
    %v99 = vld [vmem:[%s3] sm:$0xff]
    %v100 = vld [vmem:[%s3 + $0x8] sm:$0xff]
    %v101 = vadd.f32 %v97, %v99
    %v102 = vadd.f32 %v98, %v100
    %103 = vst.msk [vmem:[%s4] sm:$0xff] %vm36, %v101
    %104 = vst.msk [vmem:[%s4 + $0x8] sm:$0xff] %vm36, %v102
  $region25: #{proj_timeseries_gpt2_forward.21} parent=0 // pred_fallthru
    _
  // Predicated region
  $region26: #{proj_timeseries_gpt2_forward.21} parent=0 // pred_check
    _
  $region27: #{proj_timeseries_gpt2_forward.21} parent=0 // pred_check_branch
    %106 = sbr.rel (0) target = $region29
  $region28: #{proj_timeseries_gpt2_forward.21} parent=0 // pred_region
    _
  $region29: #{proj_timeseries_gpt2_forward.21} parent=0 // pred_fallthru
    _
  // Predicated region
  $region30: #{proj_timeseries_gpt2_forward.21} parent=0 // pred_check
    _
  $region31: #{proj_timeseries_gpt2_forward.21} parent=0 // pred_check_branch
    %108 = sbr.rel (0) target = $region33
  $region32: #{proj_timeseries_gpt2_forward.21} parent=0 // pred_region
    _
  $region33: #{proj_timeseries_gpt2_forward.21} parent=0 // pred_fallthru
    _

// kernel: proj_timeseries_gpt2_forward.16
$region0: #{proj_timeseries_gpt2_forward.16}
  #allocation0 [shape = 'u32[]', space=smem, size = 0x4, offset = 0x4, fixed_abs, tag = 'smem constant byte address 0x4 - core index']
  #allocation1 [shape = 'u32[144,128]{1,0:T(1,128)}', space=vmem, size = 0x12000, scoped, tag = 'internal scratch']
  #allocation2 [shape = 'f32[8,32]{1,0:T(8,128)}', space=vmem, size = 0x1000, scoped, tag = 'scratch operand']
  %s0 = inlined_call_operand.vmem [shape: f32[16,8], index: 0, kind: input, shape index: {}]
  %s1 = inlined_call_operand.vmem [shape: f32[8,32], index: 1, kind: input, shape index: {}]
  %s2 = inlined_call_operand.vmem [shape: f32[1,32], index: 2, kind: input, shape index: {}]
  %s3 = inlined_call_operand.vmem [shape: f32[8,32], index: 3, kind: input, shape index: {}]
  %s4 = inlined_call_operand.vmem [shape: f32[16,32], index: 4, kind: output, shape index: {}]
  %s5 = sld [smem:[#allocation0]]
  $region57: #{proj_timeseries_gpt2_forward.16} parent=0
    _
  %s7 = ssub.s32 1, %s5
  %s8 = scalar_select 0, %s7, %s5
  loop: start=0, step=1, limit=4
  $region2: #{proj_timeseries_gpt2_forward.16} parent=0 // loop_pre_header
    _
  $region3: #{proj_timeseries_gpt2_forward.16} parent=0 // loop_header
    %s10 = sphi 0, %s14
    %p11 = scmp.ge.s32.totalorder %s10, 4
    %s17 = sphi 0, %s36
    %s18 = sphi 0, %s32
    %s19 = sphi 0, %s28
    %s20 = sphi 0, %s17
    %s21 = sphi 0, %s18
    %s22 = sphi 0, %s19
    %s23 = sphi 0, %s20
    %s24 = sphi 0, %s21
    %s25 = sphi 0, %s22
    %s41 = sphi 0, %s43
    %s44 = sphi 0, %s41
    %s45 = sphi 0, %s44
    %s61 = sphi 0, %s45
    %s69 = sphi 0, %s71
    %s72 = sphi 0, %s69
    %s73 = sphi 0, %s72
    %s89 = sphi 0, %s73
    %s95 = sphi 0, %s97
    %s98 = sphi 0, %s95
    %s99 = sphi 0, %s98
    %s115 = sphi 0, %s99
    %s121 = sphi 0, %s123
    %s124 = sphi 0, %s121
    %s125 = sphi 0, %s124
    %s141 = sphi 0, %s125
    %s149 = sphi 0, %s151
    %s152 = sphi 0, %s149
    %s153 = sphi 0, %s152
    %s169 = sphi 0, %s153
  $region4: #{proj_timeseries_gpt2_forward.16} parent=0 // loop_header_branch
    %13 = sbr.rel (%p11) target = $region8
  $region5: #{proj_timeseries_gpt2_forward.16} parent=0 // loop_body
    %s15 = ssub.s32 %s10, 1
    %s16 = ssub.s32 %s10, 2
    %s26 = sadd.s32 1, %s19
    %p27 = scmp.ge.s32.totalorder %s26, 1
    %s28 = scalar_select %p27, 0, %s26
    %s29 = sadd.s32 1, %s18
    %s30 = scalar_select %p27, %s29, %s18
    %p31 = scmp.ge.s32.totalorder %s30, 1
    %s32 = scalar_select %p31, 0, %s30
    %s33 = sadd.s32 1, %s17
    %s34 = scalar_select %p31, %s33, %s17
    %p35 = scmp.ge.s32.totalorder %s34, 2
    %s36 = scalar_select %p35, 0, %s34
    %s37 = ssub.s32 %s17, %s36
    %s38 = ssub.s32 %s19, %s28
    %s39 = sor.u32 %s37, %s38
    %p40 = scmp.eq.s32.totalorder %s39, 0
    %s42 = sadd.s32 %s41, 1
    %s43 = scalar_select %p40, %s41, %s42
    %p46 = pneg %p40
    %p47 = scmp.eq.s32.totalorder %s10, 1
    %p48 = por %p46, %p47
    %p49 = scmp.ne.s32.totalorder %s41, %s44
    %p50 = scmp.eq.s32.totalorder %s10, 0
    %p51 = por %p49, %p50
    %p52 = scmp.ne.s32.totalorder %s41, %s44
    %p53 = scmp.eq.s32.totalorder %s15, 1
    %p54 = por %p52, %p53
    %p55 = scmp.ne.s32.totalorder %s44, %s45
    %p56 = scmp.eq.s32.totalorder %s15, 0
    %p57 = por %p55, %p56
    %p58 = scmp.ne.s32.totalorder %s44, %s45
    %p59 = scmp.eq.s32.totalorder %s16, 1
    %p60 = por %p58, %p59
    %p62 = scmp.ne.s32.totalorder %s45, %s61
    %p63 = scmp.eq.s32.totalorder %s16, 0
    %p64 = por %p62, %p63
    %s65 = ssub.s32 %s19, %s28
    %s66 = ssub.s32 %s18, %s32
    %s67 = sor.u32 %s65, %s66
    %p68 = scmp.eq.s32.totalorder %s67, 0
    %s70 = sadd.s32 %s69, 1
    %s71 = scalar_select %p68, %s69, %s70
    %p74 = pneg %p68
    %p75 = scmp.eq.s32.totalorder %s10, 1
    %p76 = por %p74, %p75
    %p77 = scmp.ne.s32.totalorder %s69, %s72
    %p78 = scmp.eq.s32.totalorder %s10, 0
    %p79 = por %p77, %p78
    %p80 = scmp.ne.s32.totalorder %s69, %s72
    %p81 = scmp.eq.s32.totalorder %s15, 1
    %p82 = por %p80, %p81
    %p83 = scmp.ne.s32.totalorder %s72, %s73
    %p84 = scmp.eq.s32.totalorder %s15, 0
    %p85 = por %p83, %p84
    %p86 = scmp.ne.s32.totalorder %s72, %s73
    %p87 = scmp.eq.s32.totalorder %s16, 1
    %p88 = por %p86, %p87
    %p90 = scmp.ne.s32.totalorder %s73, %s89
    %p91 = scmp.eq.s32.totalorder %s16, 0
    %p92 = por %p90, %p91
    %s93 = ssub.s32 %s18, %s32
    %p94 = scmp.eq.s32.totalorder %s93, 0
    %s96 = sadd.s32 %s95, 1
    %s97 = scalar_select %p94, %s95, %s96
    %p100 = pneg %p94
    %p101 = scmp.eq.s32.totalorder %s10, 1
    %p102 = por %p100, %p101
    %p103 = scmp.ne.s32.totalorder %s95, %s98
    %p104 = scmp.eq.s32.totalorder %s10, 0
    %p105 = por %p103, %p104
    %p106 = scmp.ne.s32.totalorder %s95, %s98
    %p107 = scmp.eq.s32.totalorder %s15, 1
    %p108 = por %p106, %p107
    %p109 = scmp.ne.s32.totalorder %s98, %s99
    %p110 = scmp.eq.s32.totalorder %s15, 0
    %p111 = por %p109, %p110
    %p112 = scmp.ne.s32.totalorder %s98, %s99
    %p113 = scmp.eq.s32.totalorder %s16, 1
    %p114 = por %p112, %p113
    %p116 = scmp.ne.s32.totalorder %s99, %s115
    %p117 = scmp.eq.s32.totalorder %s16, 0
    %p118 = por %p116, %p117
    %s119 = ssub.s32 %s18, %s32
    %p120 = scmp.eq.s32.totalorder %s119, 0
    %s122 = sadd.s32 %s121, 1
    %s123 = scalar_select %p120, %s121, %s122
    %p126 = pneg %p120
    %p127 = scmp.eq.s32.totalorder %s10, 1
    %p128 = por %p126, %p127
    %p129 = scmp.ne.s32.totalorder %s121, %s124
    %p130 = scmp.eq.s32.totalorder %s10, 0
    %p131 = por %p129, %p130
    %p132 = scmp.ne.s32.totalorder %s121, %s124
    %p133 = scmp.eq.s32.totalorder %s15, 1
    %p134 = por %p132, %p133
    %p135 = scmp.ne.s32.totalorder %s124, %s125
    %p136 = scmp.eq.s32.totalorder %s15, 0
    %p137 = por %p135, %p136
    %p138 = scmp.ne.s32.totalorder %s124, %s125
    %p139 = scmp.eq.s32.totalorder %s16, 1
    %p140 = por %p138, %p139
    %p142 = scmp.ne.s32.totalorder %s125, %s141
    %p143 = scmp.eq.s32.totalorder %s16, 0
    %p144 = por %p142, %p143
    %s145 = ssub.s32 %s17, %s36
    %s146 = ssub.s32 %s18, %s32
    %s147 = sor.u32 %s145, %s146
    %p148 = scmp.eq.s32.totalorder %s147, 0
    %s150 = sadd.s32 %s149, 1
    %s151 = scalar_select %p148, %s149, %s150
    %p154 = pneg %p148
    %p155 = scmp.eq.s32.totalorder %s10, 1
    %p156 = por %p154, %p155
    %p157 = scmp.ne.s32.totalorder %s149, %s152
    %p158 = scmp.eq.s32.totalorder %s10, 0
    %p159 = por %p157, %p158
    %p160 = scmp.ne.s32.totalorder %s149, %s152
    %p161 = scmp.eq.s32.totalorder %s15, 1
    %p162 = por %p160, %p161
    %p163 = scmp.ne.s32.totalorder %s152, %s153
    %p164 = scmp.eq.s32.totalorder %s15, 0
    %p165 = por %p163, %p164
    %p166 = scmp.ne.s32.totalorder %s152, %s153
    %p167 = scmp.eq.s32.totalorder %s16, 1
    %p168 = por %p166, %p167
    %p170 = scmp.ne.s32.totalorder %s153, %s169
    %p171 = scmp.eq.s32.totalorder %s16, 0
    %p172 = por %p170, %p171
    %p173 = scmp.le.s32.totalorder 1, %s10
    %p174 = scmp.lt.s32.totalorder %s10, 3
    %p175 = pnand %p173, %p174
    %p176 = pneg %p175
    // Predicated region
    $region9: #{proj_timeseries_gpt2_forward.16} parent=5 // pred_check
      _
    $region10: #{proj_timeseries_gpt2_forward.16} parent=5 // pred_check_branch
      %178 = sbr.rel (%p175) target = $region12
    $region11: #{proj_timeseries_gpt2_forward.16} parent=5 // pred_region
      %s179 = ssub.s32 %s10, 1
      // Predicated region
      $region13: #{proj_timeseries_gpt2_forward.16} parent=11 // pred_check
        %p180 = pneg %p85
      $region14: #{proj_timeseries_gpt2_forward.16} parent=11 // pred_check_branch
        %182 = sbr.rel (%p180) target = $region16
      $region15: #{proj_timeseries_gpt2_forward.16} parent=11 // pred_region
        %p183 = scmp.lt.s32.totalorder %s22, 0
        %s184 = scalar_select %p183, %s22, 0
        %p185 = scmp.lt.s32.totalorder %s21, 0
        %s186 = scalar_select %p185, %s21, 0
        %s187 = sadd.s32 %s186, %s184
        %s188 = smul.addr %s187, 8
        %s189 = scalar_lea.vmem %s1, %s188
      $region16: #{proj_timeseries_gpt2_forward.16} parent=11 // pred_fallthru
        _
      // Predicated region
      $region17: #{proj_timeseries_gpt2_forward.16} parent=11 // pred_check
        %p190 = pneg %p111
      $region18: #{proj_timeseries_gpt2_forward.16} parent=11 // pred_check_branch
        %192 = sbr.rel (%p190) target = $region20
      $region19: #{proj_timeseries_gpt2_forward.16} parent=11 // pred_region
        %p193 = scmp.lt.s32.totalorder %s21, 0
        %s194 = scalar_select %p193, %s21, 0
        %s195 = scalar_lea.vmem %s2, %s194
      $region20: #{proj_timeseries_gpt2_forward.16} parent=11 // pred_fallthru
        _
      // Predicated region
      $region21: #{proj_timeseries_gpt2_forward.16} parent=11 // pred_check
        %p196 = pneg %p137
      $region22: #{proj_timeseries_gpt2_forward.16} parent=11 // pred_check_branch
        %198 = sbr.rel (%p196) target = $region24
      $region23: #{proj_timeseries_gpt2_forward.16} parent=11 // pred_region
        %p199 = scmp.lt.s32.totalorder %s21, 0
        %s200 = scalar_select %p199, %s21, 0
        %s201 = smul.addr %s200, 8
        %s202 = scalar_lea.vmem %s3, %s201
      $region24: #{proj_timeseries_gpt2_forward.16} parent=11 // pred_fallthru
        _
    $region12: #{proj_timeseries_gpt2_forward.16} parent=5 // pred_fallthru
      _
    %p203 = scmp.lt.s32.totalorder %s10, 2
    // Predicated region
    $region25: #{proj_timeseries_gpt2_forward.16} parent=5 // pred_check
      %p204 = pneg %p203
    $region26: #{proj_timeseries_gpt2_forward.16} parent=5 // pred_check_branch
      %206 = sbr.rel (%p204) target = $region28
    $region27: #{proj_timeseries_gpt2_forward.16} parent=5 // pred_region
      // Predicated region
      $region29: #{proj_timeseries_gpt2_forward.16} parent=27 // pred_check
        %p207 = pneg %p51
      $region30: #{proj_timeseries_gpt2_forward.16} parent=27 // pred_check_branch
        %209 = sbr.rel (%p207) target = $region32
      $region31: #{proj_timeseries_gpt2_forward.16} parent=27 // pred_region
        %p210 = scmp.lt.s32.totalorder %s17, 1
        %s211 = scalar_select %p210, %s17, 1
        %p212 = scmp.lt.s32.totalorder %s19, 0
        %s213 = scalar_select %p212, %s19, 0
        %s214 = sadd.s32 %s213, %s211
        %s215 = smul.addr %s214, 8
        %s216 = scalar_lea.vmem %s0, %s215
      $region32: #{proj_timeseries_gpt2_forward.16} parent=27 // pred_fallthru
        _
    $region28: #{proj_timeseries_gpt2_forward.16} parent=5 // pred_fallthru
      _
    %p217 = scmp.le.s32.totalorder 1, %s10
    %p218 = scmp.lt.s32.totalorder %s10, 3
    %p219 = pnand %p217, %p218
    %p220 = pneg %p219
    // Predicated region
    $region33: #{proj_timeseries_gpt2_forward.16} parent=5 // pred_check
      _
    $region34: #{proj_timeseries_gpt2_forward.16} parent=5 // pred_check_branch
      %222 = sbr.rel (%p219) target = $region36
    $region35: #{proj_timeseries_gpt2_forward.16} parent=5 // pred_region
      %s223 = ssub.s32 %s10, 1
      %p224 = scmp.lt.s32.totalorder %s20, 1
      %s225 = scalar_select %p224, %s20, 1
      %p226 = scmp.lt.s32.totalorder %s22, 0
      %s227 = scalar_select %p226, %s22, 0
      %s228 = sadd.s32 %s227, %s225
      %s229 = smul.addr %s228, 8
      %s230 = scalar_lea.vmem %s0, %s229
      %p231 = pneg %p57
      %p232 = pneg %p54
      %p233 = scmp.lt.s32.totalorder %s22, 0
      %s234 = scalar_select %p233, %s22, 0
      %p235 = scmp.lt.s32.totalorder %s21, 0
      %s236 = scalar_select %p235, %s21, 0
      %s237 = sadd.s32 %s236, %s234
      %s238 = smul.addr %s237, 8
      %s239 = scalar_lea.vmem %s1, %s238
      %p240 = pneg %p85
      %p241 = pneg %p82
      %p242 = scmp.lt.s32.totalorder %s21, 0
      %s243 = scalar_select %p242, %s21, 0
      %s244 = scalar_lea.vmem %s2, %s243
      %p245 = pneg %p111
      %p246 = pneg %p108
      %p247 = scmp.lt.s32.totalorder %s21, 0
      %s248 = scalar_select %p247, %s21, 0
      %s249 = smul.addr %s248, 8
      %s250 = scalar_lea.vmem %s3, %s249
      %p251 = pneg %p137
      %p252 = pneg %p134
      %p253 = pneg %p165
      %p254 = pneg %p162
      %p255 = scmp.lt.s32.totalorder %s20, 1
      %s256 = scalar_select %p255, %s20, 1
      %p257 = scmp.lt.s32.totalorder %s21, 0
      %s258 = scalar_select %p257, %s21, 0
      %s259 = sadd.s32 %s258, %s256
      %s260 = smul.addr %s259, 8
      %s261 = scalar_lea.vmem %s4, %s260
      %p262 = scmp.lt.s32.totalorder %s20, 1
      %s263 = scalar_select %p262, %s20, 1
      %p264 = scmp.lt.s32.totalorder %s22, 0
      %s265 = scalar_select %p264, %s22, 0
      %s266 = sadd.s32 %s265, %s263
      %s267 = smul.addr %s266, 8
      %s268 = scalar_lea.vmem %s0, %s267
      %p269 = scmp.lt.s32.totalorder %s22, 0
      %s270 = scalar_select %p269, %s22, 0
      %p271 = scmp.lt.s32.totalorder %s21, 0
      %s272 = scalar_select %p271, %s21, 0
      %s273 = sadd.s32 %s272, %s270
      %s274 = smul.addr %s273, 8
      %s275 = scalar_lea.vmem %s1, %s274
      %p276 = scmp.lt.s32.totalorder %s21, 0
      %s277 = scalar_select %p276, %s21, 0
      %s278 = scalar_lea.vmem %s2, %s277
      %p279 = scmp.lt.s32.totalorder %s21, 0
      %s280 = scalar_select %p279, %s21, 0
      %s281 = smul.addr %s280, 8
      %s282 = scalar_lea.vmem %s3, %s281
      %p283 = scmp.lt.s32.totalorder %s20, 1
      %s284 = scalar_select %p283, %s20, 1
      %p285 = scmp.lt.s32.totalorder %s21, 0
      %s286 = scalar_select %p285, %s21, 0
      %s287 = sadd.s32 %s286, %s284
      %s288 = smul.addr %s287, 8
      %s289 = scalar_lea.vmem %s4, %s288
      %p291 = scmp.eq.s32.totalorder %s22, 0
      // Predicated region
      $region37: #{proj_timeseries_gpt2_forward.16} parent=35 // pred_check
        %p292 = pneg %p291
      $region38: #{proj_timeseries_gpt2_forward.16} parent=35 // pred_check_branch
        %294 = sbr.rel (%p292) target = $region40
      $region39: #{proj_timeseries_gpt2_forward.16} parent=35 // pred_region
        %vm295 = vcmask 261120
        %296 = vst.msk [vmem:[#allocation2] sm:$0xff] %vm295, 0.0
      $region40: #{proj_timeseries_gpt2_forward.16} parent=35 // pred_fallthru
        _
      %v297 = vld [vmem:[#allocation2] sm:$0xff]
      %v298 = vld [vmem:[%s268] sm:$0xff]
      %v299 = vpack.c.bf16 %v298, %v298
      %v300 = vld [vmem:[%s275] sm:$0xff]
      %v301 = vpack.c.bf16 %v300, %v300
      %vm302 = vcmask 64512
      %v304 = vsel %vm302, %v299, 0
      %vm306 = vcmask 1043456
      %v308 = vsel %vm306, %v301, 0
      %310 = vmatprep.subr.bf16.mxu0 0
      %311 = vmatpush1.bf16.msra.mxu0 %v308
      %312 = vmatprep.subr.bf16.mxu0 0
      %313 = vmatpush1.bf16.msra.mxu0 0
      %314 = vmatprep.subr.bf16.mxu0 0
      %315 = vmatpush1.bf16.msra.mxu0 0
      %316 = vmatprep.subr.bf16.mxu0 0
      %317 = vmatpush1.bf16.msra.mxu0 0
      %318 = vmatprep.subr.bf16.mxu0 0
      %319 = vmatpush1.bf16.msra.mxu0 0
      %320 = vmatprep.subr.bf16.mxu0 0
      %321 = vmatpush1.bf16.msra.mxu0 0
      %322 = vmatprep.subr.bf16.mxu0 0
      %323 = vmatpush1.bf16.msra.mxu0 0
      %324 = vmatprep.subr.bf16.mxu0 0
      %325 = vmatpush1.bf16.msra.mxu0 0
      %326 = vmatprep.subr.bf16.mxu0 0
      %327 = vmatpush1.bf16.msra.mxu0 0
      %328 = vmatprep.subr.bf16.mxu0 0
      %329 = vmatpush1.bf16.msra.mxu0 0
      %330 = vmatprep.subr.bf16.mxu0 0
      %331 = vmatpush1.bf16.msra.mxu0 0
      %332 = vmatprep.subr.bf16.mxu0 0
      %333 = vmatpush1.bf16.msra.mxu0 0
      %334 = vmatprep.subr.bf16.mxu0 0
      %335 = vmatpush1.bf16.msra.mxu0 0
      %336 = vmatprep.subr.bf16.mxu0 0
      %337 = vmatpush1.bf16.msra.mxu0 0
      %338 = vmatprep.subr.bf16.mxu0 0
      %339 = vmatpush1.bf16.msra.mxu0 0
      %340 = vmatprep.subr.bf16.mxu0 0
      %341 = vmatpush1.bf16.msra.mxu0 0
      %342 = vmatprep.mubr.bf16.mxu0 0
      %343 = vmatmul.mubr.bf16.gmra.mrb[0].mxu0 %v304
      %v344 = vpop.f32.mrb[0].mxu0
      %v345 = vadd.f32 0.0, %v344
      %v346 = vpop.f32.mrb[0].mxu0
      %v347 = vpop.f32.mrb[0].mxu0
      %v348 = vpop.f32.mrb[0].mxu0
      %349 = vdwg.mxu0
      %v350 = vadd.f32 %v297, %v345
      %vm351 = vcmask 261120
      %352 = vst.msk [vmem:[#allocation2] sm:$0xff] %vm351, %v350
      // Predicated region
      $region41: #{proj_timeseries_gpt2_forward.16} parent=35 // pred_check
        %p353 = pneg %p291
      $region42: #{proj_timeseries_gpt2_forward.16} parent=35 // pred_check_branch
        %355 = sbr.rel (%p353) target = $region44
      $region43: #{proj_timeseries_gpt2_forward.16} parent=35 // pred_region
        %v356 = vld [vmem:[#allocation2] sm:$0xff]
        %v357 = vld [vmem:[%s278] sm:$0x1]
        %v359 = vlaneseq
        %v360 = vshrl.u32 %v359, 7
        %v361 = vsub.s32 0, %v360
        %v362 = vrot.slane %v357, %v361
        %v364 = vadd.f32 %v356, %v362
        %v365 = vld [vmem:[%s282] sm:$0xff]
        %v366 = vadd.f32 %v364, %v365
        %367 = vst.msk [vmem:[%s289] sm:$0xff] %vm351, %v366
      $region44: #{proj_timeseries_gpt2_forward.16} parent=35 // pred_fallthru
        _
      %p368 = scmp.lt.s32.totalorder %s20, 1
      %s369 = scalar_select %p368, %s20, 1
      %p370 = scmp.lt.s32.totalorder %s21, 0
      %s371 = scalar_select %p370, %s21, 0
      %s372 = sadd.s32 %s371, %s369
      %s373 = smul.addr %s372, 8
      %s374 = scalar_lea.vmem %s4, %s373
      // Predicated region
      $region45: #{proj_timeseries_gpt2_forward.16} parent=35 // pred_check
        %p375 = pneg %p162
      $region46: #{proj_timeseries_gpt2_forward.16} parent=35 // pred_check_branch
        %377 = sbr.rel (%p375) target = $region48
      $region47: #{proj_timeseries_gpt2_forward.16} parent=35 // pred_region
        _
      $region48: #{proj_timeseries_gpt2_forward.16} parent=35 // pred_fallthru
        _
    $region36: #{proj_timeseries_gpt2_forward.16} parent=5 // pred_fallthru
      _
    %p378 = scmp.le.s32.totalorder 2, %s10
    // Predicated region
    $region49: #{proj_timeseries_gpt2_forward.16} parent=5 // pred_check
      %p379 = pneg %p378
    $region50: #{proj_timeseries_gpt2_forward.16} parent=5 // pred_check_branch
      %381 = sbr.rel (%p379) target = $region52
    $region51: #{proj_timeseries_gpt2_forward.16} parent=5 // pred_region
      %s382 = ssub.s32 %s10, 2
      // Predicated region
      $region53: #{proj_timeseries_gpt2_forward.16} parent=51 // pred_check
        %p383 = pneg %p168
      $region54: #{proj_timeseries_gpt2_forward.16} parent=51 // pred_check_branch
        %385 = sbr.rel (%p383) target = $region56
      $region55: #{proj_timeseries_gpt2_forward.16} parent=51 // pred_region
        %p386 = scmp.lt.s32.totalorder %s23, 1
        %s387 = scalar_select %p386, %s23, 1
        %p388 = scmp.lt.s32.totalorder %s24, 0
        %s389 = scalar_select %p388, %s24, 0
        %s390 = sadd.s32 %s389, %s387
        %s391 = smul.addr %s390, 8
        %s392 = scalar_lea.vmem %s4, %s391
      $region56: #{proj_timeseries_gpt2_forward.16} parent=51 // pred_fallthru
        _
    $region52: #{proj_timeseries_gpt2_forward.16} parent=5 // pred_fallthru
      _
  $region6: #{proj_timeseries_gpt2_forward.16} parent=0 // loop_footer
    %s14 = sadd.s32 1, %s10
  $region7: #{proj_timeseries_gpt2_forward.16} parent=0 // loop_footer_branch
    %9 = sbr.rel target = $region3
  $region8: #{proj_timeseries_gpt2_forward.16} parent=0 // loop_exit
    _

// kernel: proj_timeseries_gpt2_forward.20
$region0: #{proj_timeseries_gpt2_forward.20}
  #allocation0 [shape = 'u32[]', space=smem, size = 0x4, offset = 0x4, fixed_abs, tag = 'smem constant byte address 0x4 - core index']
  #allocation1 [shape = 'u32[144,128]{1,0:T(1,128)}', space=vmem, size = 0x12000, scoped, tag = 'internal scratch']
  %s0 = inlined_call_operand.vmem [shape: f32[2,8,32], index: 0, kind: input, shape index: {}]
  %s1 = inlined_call_operand.vmem [shape: f32[2,8,32], index: 1, kind: input, shape index: {}]
  %s2 = inlined_call_operand.vmem [shape: f32[2,8,32], index: 2, kind: input, shape index: {}]
  %s3 = inlined_call_operand.vmem [shape: f32[2,8,32], index: 3, kind: output, shape index: {}]
  %s4 = sld [smem:[#allocation0]]
  $region45: #{proj_timeseries_gpt2_forward.20} parent=0
    _
  %s6 = ssub.s32 1, %s4
  %s7 = scalar_select 0, %s6, %s4
  loop: start=0, step=1, limit=4
  $region2: #{proj_timeseries_gpt2_forward.20} parent=0 // loop_pre_header
    _
  $region3: #{proj_timeseries_gpt2_forward.20} parent=0 // loop_header
    %s9 = sphi 0, %s13
    %p10 = scmp.ge.s32.totalorder %s9, 4
    %s16 = sphi 0, %s28
    %s17 = sphi 0, %s24
    %s18 = sphi 0, %s16
    %s19 = sphi 0, %s17
    %s20 = sphi 0, %s18
    %s21 = sphi 0, %s19
    %s33 = sphi 0, %s35
    %s36 = sphi 0, %s33
    %s37 = sphi 0, %s36
    %s53 = sphi 0, %s37
    %s61 = sphi 0, %s63
    %s64 = sphi 0, %s61
    %s65 = sphi 0, %s64
    %s81 = sphi 0, %s65
    %s89 = sphi 0, %s91
    %s92 = sphi 0, %s89
    %s93 = sphi 0, %s92
    %s109 = sphi 0, %s93
    %s117 = sphi 0, %s119
    %s120 = sphi 0, %s117
    %s121 = sphi 0, %s120
    %s137 = sphi 0, %s121
  $region4: #{proj_timeseries_gpt2_forward.20} parent=0 // loop_header_branch
    %12 = sbr.rel (%p10) target = $region8
  $region5: #{proj_timeseries_gpt2_forward.20} parent=0 // loop_body
    %s14 = ssub.s32 %s9, 1
    %s15 = ssub.s32 %s9, 2
    %s22 = sadd.s32 1, %s17
    %p23 = scmp.ge.s32.totalorder %s22, 1
    %s24 = scalar_select %p23, 0, %s22
    %s25 = sadd.s32 1, %s16
    %s26 = scalar_select %p23, %s25, %s16
    %p27 = scmp.ge.s32.totalorder %s26, 2
    %s28 = scalar_select %p27, 0, %s26
    %s29 = ssub.s32 %s16, %s28
    %s30 = ssub.s32 %s17, %s24
    %s31 = sor.u32 %s29, %s30
    %p32 = scmp.eq.s32.totalorder %s31, 0
    %s34 = sadd.s32 %s33, 1
    %s35 = scalar_select %p32, %s33, %s34
    %p38 = pneg %p32
    %p39 = scmp.eq.s32.totalorder %s9, 1
    %p40 = por %p38, %p39
    %p41 = scmp.ne.s32.totalorder %s33, %s36
    %p42 = scmp.eq.s32.totalorder %s9, 0
    %p43 = por %p41, %p42
    %p44 = scmp.ne.s32.totalorder %s33, %s36
    %p45 = scmp.eq.s32.totalorder %s14, 1
    %p46 = por %p44, %p45
    %p47 = scmp.ne.s32.totalorder %s36, %s37
    %p48 = scmp.eq.s32.totalorder %s14, 0
    %p49 = por %p47, %p48
    %p50 = scmp.ne.s32.totalorder %s36, %s37
    %p51 = scmp.eq.s32.totalorder %s15, 1
    %p52 = por %p50, %p51
    %p54 = scmp.ne.s32.totalorder %s37, %s53
    %p55 = scmp.eq.s32.totalorder %s15, 0
    %p56 = por %p54, %p55
    %s57 = ssub.s32 %s16, %s28
    %s58 = ssub.s32 %s17, %s24
    %s59 = sor.u32 %s57, %s58
    %p60 = scmp.eq.s32.totalorder %s59, 0
    %s62 = sadd.s32 %s61, 1
    %s63 = scalar_select %p60, %s61, %s62
    %p66 = pneg %p60
    %p67 = scmp.eq.s32.totalorder %s9, 1
    %p68 = por %p66, %p67
    %p69 = scmp.ne.s32.totalorder %s61, %s64
    %p70 = scmp.eq.s32.totalorder %s9, 0
    %p71 = por %p69, %p70
    %p72 = scmp.ne.s32.totalorder %s61, %s64
    %p73 = scmp.eq.s32.totalorder %s14, 1
    %p74 = por %p72, %p73
    %p75 = scmp.ne.s32.totalorder %s64, %s65
    %p76 = scmp.eq.s32.totalorder %s14, 0
    %p77 = por %p75, %p76
    %p78 = scmp.ne.s32.totalorder %s64, %s65
    %p79 = scmp.eq.s32.totalorder %s15, 1
    %p80 = por %p78, %p79
    %p82 = scmp.ne.s32.totalorder %s65, %s81
    %p83 = scmp.eq.s32.totalorder %s15, 0
    %p84 = por %p82, %p83
    %s85 = ssub.s32 %s16, %s28
    %s86 = ssub.s32 %s17, %s24
    %s87 = sor.u32 %s85, %s86
    %p88 = scmp.eq.s32.totalorder %s87, 0
    %s90 = sadd.s32 %s89, 1
    %s91 = scalar_select %p88, %s89, %s90
    %p94 = pneg %p88
    %p95 = scmp.eq.s32.totalorder %s9, 1
    %p96 = por %p94, %p95
    %p97 = scmp.ne.s32.totalorder %s89, %s92
    %p98 = scmp.eq.s32.totalorder %s9, 0
    %p99 = por %p97, %p98
    %p100 = scmp.ne.s32.totalorder %s89, %s92
    %p101 = scmp.eq.s32.totalorder %s14, 1
    %p102 = por %p100, %p101
    %p103 = scmp.ne.s32.totalorder %s92, %s93
    %p104 = scmp.eq.s32.totalorder %s14, 0
    %p105 = por %p103, %p104
    %p106 = scmp.ne.s32.totalorder %s92, %s93
    %p107 = scmp.eq.s32.totalorder %s15, 1
    %p108 = por %p106, %p107
    %p110 = scmp.ne.s32.totalorder %s93, %s109
    %p111 = scmp.eq.s32.totalorder %s15, 0
    %p112 = por %p110, %p111
    %s113 = ssub.s32 %s16, %s28
    %s114 = ssub.s32 %s17, %s24
    %s115 = sor.u32 %s113, %s114
    %p116 = scmp.eq.s32.totalorder %s115, 0
    %s118 = sadd.s32 %s117, 1
    %s119 = scalar_select %p116, %s117, %s118
    %p122 = pneg %p116
    %p123 = scmp.eq.s32.totalorder %s9, 1
    %p124 = por %p122, %p123
    %p125 = scmp.ne.s32.totalorder %s117, %s120
    %p126 = scmp.eq.s32.totalorder %s9, 0
    %p127 = por %p125, %p126
    %p128 = scmp.ne.s32.totalorder %s117, %s120
    %p129 = scmp.eq.s32.totalorder %s14, 1
    %p130 = por %p128, %p129
    %p131 = scmp.ne.s32.totalorder %s120, %s121
    %p132 = scmp.eq.s32.totalorder %s14, 0
    %p133 = por %p131, %p132
    %p134 = scmp.ne.s32.totalorder %s120, %s121
    %p135 = scmp.eq.s32.totalorder %s15, 1
    %p136 = por %p134, %p135
    %p138 = scmp.ne.s32.totalorder %s121, %s137
    %p139 = scmp.eq.s32.totalorder %s15, 0
    %p140 = por %p138, %p139
    %p141 = scmp.le.s32.totalorder 1, %s9
    %p142 = scmp.lt.s32.totalorder %s9, 3
    %p143 = pnand %p141, %p142
    %p144 = pneg %p143
    // Predicated region
    $region9: #{proj_timeseries_gpt2_forward.20} parent=5 // pred_check
      _
    $region10: #{proj_timeseries_gpt2_forward.20} parent=5 // pred_check_branch
      %146 = sbr.rel (%p143) target = $region12
    $region11: #{proj_timeseries_gpt2_forward.20} parent=5 // pred_region
      %s147 = ssub.s32 %s9, 1
    $region12: #{proj_timeseries_gpt2_forward.20} parent=5 // pred_fallthru
      _
    %p148 = scmp.lt.s32.totalorder %s9, 2
    // Predicated region
    $region13: #{proj_timeseries_gpt2_forward.20} parent=5 // pred_check
      %p149 = pneg %p148
    $region14: #{proj_timeseries_gpt2_forward.20} parent=5 // pred_check_branch
      %151 = sbr.rel (%p149) target = $region16
    $region15: #{proj_timeseries_gpt2_forward.20} parent=5 // pred_region
      // Predicated region
      $region17: #{proj_timeseries_gpt2_forward.20} parent=15 // pred_check
        %p152 = pneg %p43
      $region18: #{proj_timeseries_gpt2_forward.20} parent=15 // pred_check_branch
        %154 = sbr.rel (%p152) target = $region20
      $region19: #{proj_timeseries_gpt2_forward.20} parent=15 // pred_region
        %p155 = scmp.lt.s32.totalorder %s16, 1
        %s156 = scalar_select %p155, %s16, 1
        %p157 = scmp.lt.s32.totalorder %s17, 0
        %s158 = scalar_select %p157, %s17, 0
        %s159 = sadd.s32 %s158, %s156
        %s160 = smul.addr %s159, 8
        %s161 = scalar_lea.vmem %s0, %s160
      $region20: #{proj_timeseries_gpt2_forward.20} parent=15 // pred_fallthru
        _
      // Predicated region
      $region21: #{proj_timeseries_gpt2_forward.20} parent=15 // pred_check
        %p162 = pneg %p71
      $region22: #{proj_timeseries_gpt2_forward.20} parent=15 // pred_check_branch
        %164 = sbr.rel (%p162) target = $region24
      $region23: #{proj_timeseries_gpt2_forward.20} parent=15 // pred_region
        %p165 = scmp.lt.s32.totalorder %s16, 1
        %s166 = scalar_select %p165, %s16, 1
        %p167 = scmp.lt.s32.totalorder %s17, 0
        %s168 = scalar_select %p167, %s17, 0
        %s169 = sadd.s32 %s168, %s166
        %s170 = smul.addr %s169, 8
        %s171 = scalar_lea.vmem %s1, %s170
      $region24: #{proj_timeseries_gpt2_forward.20} parent=15 // pred_fallthru
        _
      // Predicated region
      $region25: #{proj_timeseries_gpt2_forward.20} parent=15 // pred_check
        %p172 = pneg %p99
      $region26: #{proj_timeseries_gpt2_forward.20} parent=15 // pred_check_branch
        %174 = sbr.rel (%p172) target = $region28
      $region27: #{proj_timeseries_gpt2_forward.20} parent=15 // pred_region
        %p175 = scmp.lt.s32.totalorder %s16, 1
        %s176 = scalar_select %p175, %s16, 1
        %p177 = scmp.lt.s32.totalorder %s17, 0
        %s178 = scalar_select %p177, %s17, 0
        %s179 = sadd.s32 %s178, %s176
        %s180 = smul.addr %s179, 8
        %s181 = scalar_lea.vmem %s2, %s180
      $region28: #{proj_timeseries_gpt2_forward.20} parent=15 // pred_fallthru
        _
    $region16: #{proj_timeseries_gpt2_forward.20} parent=5 // pred_fallthru
      _
    %p182 = scmp.le.s32.totalorder 1, %s9
    %p183 = scmp.lt.s32.totalorder %s9, 3
    %p184 = pnand %p182, %p183
    %p185 = pneg %p184
    // Predicated region
    $region29: #{proj_timeseries_gpt2_forward.20} parent=5 // pred_check
      _
    $region30: #{proj_timeseries_gpt2_forward.20} parent=5 // pred_check_branch
      %187 = sbr.rel (%p184) target = $region32
    $region31: #{proj_timeseries_gpt2_forward.20} parent=5 // pred_region
      %s188 = ssub.s32 %s9, 1
      %p189 = scmp.lt.s32.totalorder %s18, 1
      %s190 = scalar_select %p189, %s18, 1
      %p191 = scmp.lt.s32.totalorder %s19, 0
      %s192 = scalar_select %p191, %s19, 0
      %s193 = sadd.s32 %s192, %s190
      %s194 = smul.addr %s193, 8
      %s195 = scalar_lea.vmem %s0, %s194
      %p196 = pneg %p49
      %p197 = pneg %p46
      %p198 = scmp.lt.s32.totalorder %s18, 1
      %s199 = scalar_select %p198, %s18, 1
      %p200 = scmp.lt.s32.totalorder %s19, 0
      %s201 = scalar_select %p200, %s19, 0
      %s202 = sadd.s32 %s201, %s199
      %s203 = smul.addr %s202, 8
      %s204 = scalar_lea.vmem %s1, %s203
      %p205 = pneg %p77
      %p206 = pneg %p74
      %p207 = scmp.lt.s32.totalorder %s18, 1
      %s208 = scalar_select %p207, %s18, 1
      %p209 = scmp.lt.s32.totalorder %s19, 0
      %s210 = scalar_select %p209, %s19, 0
      %s211 = sadd.s32 %s210, %s208
      %s212 = smul.addr %s211, 8
      %s213 = scalar_lea.vmem %s2, %s212
      %p214 = pneg %p105
      %p215 = pneg %p102
      %p216 = pneg %p133
      %p217 = pneg %p130
      %p218 = scmp.lt.s32.totalorder %s18, 1
      %s219 = scalar_select %p218, %s18, 1
      %p220 = scmp.lt.s32.totalorder %s19, 0
      %s221 = scalar_select %p220, %s19, 0
      %s222 = sadd.s32 %s221, %s219
      %s223 = smul.addr %s222, 8
      %s224 = scalar_lea.vmem %s3, %s223
      %p225 = scmp.lt.s32.totalorder %s18, 1
      %s226 = scalar_select %p225, %s18, 1
      %p227 = scmp.lt.s32.totalorder %s19, 0
      %s228 = scalar_select %p227, %s19, 0
      %s229 = sadd.s32 %s228, %s226
      %s230 = smul.addr %s229, 8
      %s231 = scalar_lea.vmem %s0, %s230
      %p232 = scmp.lt.s32.totalorder %s18, 1
      %s233 = scalar_select %p232, %s18, 1
      %p234 = scmp.lt.s32.totalorder %s19, 0
      %s235 = scalar_select %p234, %s19, 0
      %s236 = sadd.s32 %s235, %s233
      %s237 = smul.addr %s236, 8
      %s238 = scalar_lea.vmem %s1, %s237
      %p239 = scmp.lt.s32.totalorder %s18, 1
      %s240 = scalar_select %p239, %s18, 1
      %p241 = scmp.lt.s32.totalorder %s19, 0
      %s242 = scalar_select %p241, %s19, 0
      %s243 = sadd.s32 %s242, %s240
      %s244 = smul.addr %s243, 8
      %s245 = scalar_lea.vmem %s2, %s244
      %p246 = scmp.lt.s32.totalorder %s18, 1
      %s247 = scalar_select %p246, %s18, 1
      %p248 = scmp.lt.s32.totalorder %s19, 0
      %s249 = scalar_select %p248, %s19, 0
      %s250 = sadd.s32 %s249, %s247
      %s251 = smul.addr %s250, 8
      %s252 = scalar_lea.vmem %s3, %s251
      %v254 = vld [vmem:[%s231] sm:$0xff]
      %v255 = vld [vmem:[%s238] sm:$0xff]
      %v256 = vld [vmem:[%s245] sm:$0xff]
      %v257 = vlaneseq
      %v258 = vshrl.u32 %v257, 7
      %v259 = vlaneseq
      %v260 = vand.u32 %v259, 127
      %vm261 = vcmp.ge.s32.totalorder %v258, %v260
      %v262 = vmul.f32 %v254, 0.35355338
      %v263 = vpack.c.bf16 %v262, %v262
      %v264 = vpack.c.bf16 %v255, %v255
      %v265 = vpack.c.bf16 %v256, %v256
      %vm266 = vcmask 64512
      %v268 = vsel %vm266, %v263, 0
      %v271 = vsel %vm266, %v264, 0
      %273 = vmatprep.subr.bf16.mxu0 0
      %274 = vmatpush1.bf16.xpose.msra.mxu0 %v271
      %275 = vmatprep.subr.bf16.mxu0 0
      %276 = vmatpush1.bf16.xpose.msra.mxu0 0
      %277 = vmatprep.subr.bf16.mxu0 0
      %278 = vmatpush1.bf16.xpose.msra.mxu0 0
      %279 = vmatprep.subr.bf16.mxu0 0
      %280 = vmatpush1.bf16.xpose.msra.mxu0 0
      %281 = vmatprep.subr.bf16.mxu0 0
      %282 = vmatpush1.bf16.xpose.msra.mxu0 0
      %283 = vmatprep.subr.bf16.mxu0 0
      %284 = vmatpush1.bf16.xpose.msra.mxu0 0
      %285 = vmatprep.subr.bf16.mxu0 0
      %286 = vmatpush1.bf16.xpose.msra.mxu0 0
      %287 = vmatprep.subr.bf16.mxu0 0
      %288 = vmatpush1.bf16.xpose.msra.mxu0 0
      %289 = vmatprep.subr.bf16.mxu0 0
      %290 = vmatpush1.bf16.xpose.msra.mxu0 0
      %291 = vmatprep.subr.bf16.mxu0 0
      %292 = vmatpush1.bf16.xpose.msra.mxu0 0
      %293 = vmatprep.subr.bf16.mxu0 0
      %294 = vmatpush1.bf16.xpose.msra.mxu0 0
      %295 = vmatprep.subr.bf16.mxu0 0
      %296 = vmatpush1.bf16.xpose.msra.mxu0 0
      %297 = vmatprep.subr.bf16.mxu0 0
      %298 = vmatpush1.bf16.xpose.msra.mxu0 0
      %299 = vmatprep.subr.bf16.mxu0 0
      %300 = vmatpush1.bf16.xpose.msra.mxu0 0
      %301 = vmatprep.subr.bf16.mxu0 0
      %302 = vmatpush1.bf16.xpose.msra.mxu0 0
      %303 = vmatprep.subr.bf16.mxu0 0
      %304 = vmatpush1.bf16.xpose.msra.mxu0 0
      %305 = vmatprep.mubr.bf16.mxu0 0
      %306 = vmatmul.mubr.bf16.gmra.mrb[0].mxu0 %v268
      %v307 = vpop.f32.mrb[0].mxu0
      %v308 = vadd.f32 0.0, %v307
      %v309 = vpop.f32.mrb[0].mxu0
      %v310 = vpop.f32.mrb[0].mxu0
      %v311 = vpop.f32.mrb[0].mxu0
      %312 = vdwg.mxu0
      %v313 = vsel %vm261, %v308, -1e+30
      %v314 = vsel %vm266, %v313, -inf
      %315 = vmax.xlane.f32.xlu0 %v314
      %v316 = vpop.xlane.xlu0 %315
      %v317 = vsub.f32 %v313, %v316
      %v318 = vmul.f32 %v317, 1.442695
      %v319 = vpow.pop %v318
      %v320 = vsel %vm266, %v319, 0.0
      %321 = vadd.xlane.f32.xlu0 %v320
      %v322 = vpop.xlane.xlu0 %321
      %v323 = vrcp.pop %v322
      %v324 = vmul.f32 %v319, %v323
      %v325 = vpack.c.bf16 %v324, %v324
      %v327 = vsel %vm266, %v325, 0
      %vm329 = vcmask 1043456
      %v331 = vsel %vm329, %v265, 0
      %333 = vmatprep.subr.bf16.mxu0 0
      %334 = vmatpush1.bf16.msra.mxu0 %v331
      %335 = vmatprep.subr.bf16.mxu0 0
      %336 = vmatpush1.bf16.msra.mxu0 0
      %337 = vmatprep.subr.bf16.mxu0 0
      %338 = vmatpush1.bf16.msra.mxu0 0
      %339 = vmatprep.subr.bf16.mxu0 0
      %340 = vmatpush1.bf16.msra.mxu0 0
      %341 = vmatprep.subr.bf16.mxu0 0
      %342 = vmatpush1.bf16.msra.mxu0 0
      %343 = vmatprep.subr.bf16.mxu0 0
      %344 = vmatpush1.bf16.msra.mxu0 0
      %345 = vmatprep.subr.bf16.mxu0 0
      %346 = vmatpush1.bf16.msra.mxu0 0
      %347 = vmatprep.subr.bf16.mxu0 0
      %348 = vmatpush1.bf16.msra.mxu0 0
      %349 = vmatprep.subr.bf16.mxu0 0
      %350 = vmatpush1.bf16.msra.mxu0 0
      %351 = vmatprep.subr.bf16.mxu0 0
      %352 = vmatpush1.bf16.msra.mxu0 0
      %353 = vmatprep.subr.bf16.mxu0 0
      %354 = vmatpush1.bf16.msra.mxu0 0
      %355 = vmatprep.subr.bf16.mxu0 0
      %356 = vmatpush1.bf16.msra.mxu0 0
      %357 = vmatprep.subr.bf16.mxu0 0
      %358 = vmatpush1.bf16.msra.mxu0 0
      %359 = vmatprep.subr.bf16.mxu0 0
      %360 = vmatpush1.bf16.msra.mxu0 0
      %361 = vmatprep.subr.bf16.mxu0 0
      %362 = vmatpush1.bf16.msra.mxu0 0
      %363 = vmatprep.subr.bf16.mxu0 0
      %364 = vmatpush1.bf16.msra.mxu0 0
      %365 = vmatprep.mubr.bf16.mxu0 0
      %366 = vmatmul.mubr.bf16.gmra.mrb[0].mxu0 %v327
      %v367 = vpop.f32.mrb[0].mxu0
      %v368 = vadd.f32 0.0, %v367
      %v369 = vpop.f32.mrb[0].mxu0
      %v370 = vpop.f32.mrb[0].mxu0
      %v371 = vpop.f32.mrb[0].mxu0
      %372 = vdwg.mxu0
      %374 = vrot.lane.b32.xlu0 %v263, 120
      %v375 = vpop.permute.xlu0 %374
      %377 = vrot.lane.b32.xlu0 %v264, 120
      %v378 = vpop.permute.xlu0 %377
      %v380 = vsel %vm266, %v375, 0
      %v383 = vsel %vm266, %v378, 0
      %385 = vmatprep.subr.bf16.mxu0 0
      %386 = vmatpush1.bf16.xpose.msra.mxu0 %v383
      %387 = vmatprep.subr.bf16.mxu0 0
      %388 = vmatpush1.bf16.xpose.msra.mxu0 0
      %389 = vmatprep.subr.bf16.mxu0 0
      %390 = vmatpush1.bf16.xpose.msra.mxu0 0
      %391 = vmatprep.subr.bf16.mxu0 0
      %392 = vmatpush1.bf16.xpose.msra.mxu0 0
      %393 = vmatprep.subr.bf16.mxu0 0
      %394 = vmatpush1.bf16.xpose.msra.mxu0 0
      %395 = vmatprep.subr.bf16.mxu0 0
      %396 = vmatpush1.bf16.xpose.msra.mxu0 0
      %397 = vmatprep.subr.bf16.mxu0 0
      %398 = vmatpush1.bf16.xpose.msra.mxu0 0
      %399 = vmatprep.subr.bf16.mxu0 0
      %400 = vmatpush1.bf16.xpose.msra.mxu0 0
      %401 = vmatprep.subr.bf16.mxu0 0
      %402 = vmatpush1.bf16.xpose.msra.mxu0 0
      %403 = vmatprep.subr.bf16.mxu0 0
      %404 = vmatpush1.bf16.xpose.msra.mxu0 0
      %405 = vmatprep.subr.bf16.mxu0 0
      %406 = vmatpush1.bf16.xpose.msra.mxu0 0
      %407 = vmatprep.subr.bf16.mxu0 0
      %408 = vmatpush1.bf16.xpose.msra.mxu0 0
      %409 = vmatprep.subr.bf16.mxu0 0
      %410 = vmatpush1.bf16.xpose.msra.mxu0 0
      %411 = vmatprep.subr.bf16.mxu0 0
      %412 = vmatpush1.bf16.xpose.msra.mxu0 0
      %413 = vmatprep.subr.bf16.mxu0 0
      %414 = vmatpush1.bf16.xpose.msra.mxu0 0
      %415 = vmatprep.subr.bf16.mxu0 0
      %416 = vmatpush1.bf16.xpose.msra.mxu0 0
      %417 = vmatprep.mubr.bf16.mxu0 0
      %418 = vmatmul.mubr.bf16.gmra.mrb[0].mxu0 %v380
      %v419 = vpop.f32.mrb[0].mxu0
      %v420 = vadd.f32 0.0, %v419
      %v421 = vpop.f32.mrb[0].mxu0
      %v422 = vpop.f32.mrb[0].mxu0
      %v423 = vpop.f32.mrb[0].mxu0
      %424 = vdwg.mxu0
      %v425 = vsel %vm261, %v420, -1e+30
      %v426 = vsel %vm266, %v425, -inf
      %427 = vmax.xlane.f32.xlu0 %v426
      %v428 = vpop.xlane.xlu0 %427
      %v429 = vsub.f32 %v425, %v428
      %v430 = vmul.f32 %v429, 1.442695
      %v431 = vpow.pop %v430
      %v432 = vsel %vm266, %v431, 0.0
      %433 = vadd.xlane.f32.xlu0 %v432
      %v434 = vpop.xlane.xlu0 %433
      %v435 = vrcp.pop %v434
      %v436 = vmul.f32 %v431, %v435
      %v437 = vpack.c.bf16 %v436, %v436
      %439 = vrot.lane.b32.xlu0 %v265, 120
      %v440 = vpop.permute.xlu0 %439
      %v442 = vsel %vm266, %v437, 0
      %v445 = vsel %vm329, %v440, 0
      %447 = vmatprep.subr.bf16.mxu0 0
      %448 = vmatpush1.bf16.msra.mxu0 %v445
      %449 = vmatprep.subr.bf16.mxu0 0
      %450 = vmatpush1.bf16.msra.mxu0 0
      %451 = vmatprep.subr.bf16.mxu0 0
      %452 = vmatpush1.bf16.msra.mxu0 0
      %453 = vmatprep.subr.bf16.mxu0 0
      %454 = vmatpush1.bf16.msra.mxu0 0
      %455 = vmatprep.subr.bf16.mxu0 0
      %456 = vmatpush1.bf16.msra.mxu0 0
      %457 = vmatprep.subr.bf16.mxu0 0
      %458 = vmatpush1.bf16.msra.mxu0 0
      %459 = vmatprep.subr.bf16.mxu0 0
      %460 = vmatpush1.bf16.msra.mxu0 0
      %461 = vmatprep.subr.bf16.mxu0 0
      %462 = vmatpush1.bf16.msra.mxu0 0
      %463 = vmatprep.subr.bf16.mxu0 0
      %464 = vmatpush1.bf16.msra.mxu0 0
      %465 = vmatprep.subr.bf16.mxu0 0
      %466 = vmatpush1.bf16.msra.mxu0 0
      %467 = vmatprep.subr.bf16.mxu0 0
      %468 = vmatpush1.bf16.msra.mxu0 0
      %469 = vmatprep.subr.bf16.mxu0 0
      %470 = vmatpush1.bf16.msra.mxu0 0
      %471 = vmatprep.subr.bf16.mxu0 0
      %472 = vmatpush1.bf16.msra.mxu0 0
      %473 = vmatprep.subr.bf16.mxu0 0
      %474 = vmatpush1.bf16.msra.mxu0 0
      %475 = vmatprep.subr.bf16.mxu0 0
      %476 = vmatpush1.bf16.msra.mxu0 0
      %477 = vmatprep.subr.bf16.mxu0 0
      %478 = vmatpush1.bf16.msra.mxu0 0
      %479 = vmatprep.mubr.bf16.mxu0 0
      %480 = vmatmul.mubr.bf16.gmra.mrb[0].mxu0 %v442
      %v481 = vpop.f32.mrb[0].mxu0
      %v482 = vadd.f32 0.0, %v481
      %v483 = vpop.f32.mrb[0].mxu0
      %v484 = vpop.f32.mrb[0].mxu0
      %v485 = vpop.f32.mrb[0].mxu0
      %486 = vdwg.mxu0
      %487 = vrot.lane.b32.xlu0 %v263, 112
      %v488 = vpop.permute.xlu0 %487
      %489 = vrot.lane.b32.xlu0 %v264, 112
      %v490 = vpop.permute.xlu0 %489
      %v492 = vsel %vm266, %v488, 0
      %v495 = vsel %vm266, %v490, 0
      %497 = vmatprep.subr.bf16.mxu0 0
      %498 = vmatpush1.bf16.xpose.msra.mxu0 %v495
      %499 = vmatprep.subr.bf16.mxu0 0
      %500 = vmatpush1.bf16.xpose.msra.mxu0 0
      %501 = vmatprep.subr.bf16.mxu0 0
      %502 = vmatpush1.bf16.xpose.msra.mxu0 0
      %503 = vmatprep.subr.bf16.mxu0 0
      %504 = vmatpush1.bf16.xpose.msra.mxu0 0
      %505 = vmatprep.subr.bf16.mxu0 0
      %506 = vmatpush1.bf16.xpose.msra.mxu0 0
      %507 = vmatprep.subr.bf16.mxu0 0
      %508 = vmatpush1.bf16.xpose.msra.mxu0 0
      %509 = vmatprep.subr.bf16.mxu0 0
      %510 = vmatpush1.bf16.xpose.msra.mxu0 0
      %511 = vmatprep.subr.bf16.mxu0 0
      %512 = vmatpush1.bf16.xpose.msra.mxu0 0
      %513 = vmatprep.subr.bf16.mxu0 0
      %514 = vmatpush1.bf16.xpose.msra.mxu0 0
      %515 = vmatprep.subr.bf16.mxu0 0
      %516 = vmatpush1.bf16.xpose.msra.mxu0 0
      %517 = vmatprep.subr.bf16.mxu0 0
      %518 = vmatpush1.bf16.xpose.msra.mxu0 0
      %519 = vmatprep.subr.bf16.mxu0 0
      %520 = vmatpush1.bf16.xpose.msra.mxu0 0
      %521 = vmatprep.subr.bf16.mxu0 0
      %522 = vmatpush1.bf16.xpose.msra.mxu0 0
      %523 = vmatprep.subr.bf16.mxu0 0
      %524 = vmatpush1.bf16.xpose.msra.mxu0 0
      %525 = vmatprep.subr.bf16.mxu0 0
      %526 = vmatpush1.bf16.xpose.msra.mxu0 0
      %527 = vmatprep.subr.bf16.mxu0 0
      %528 = vmatpush1.bf16.xpose.msra.mxu0 0
      %529 = vmatprep.mubr.bf16.mxu0 0
      %530 = vmatmul.mubr.bf16.gmra.mrb[0].mxu0 %v492
      %v531 = vpop.f32.mrb[0].mxu0
      %v532 = vadd.f32 0.0, %v531
      %v533 = vpop.f32.mrb[0].mxu0
      %v534 = vpop.f32.mrb[0].mxu0
      %v535 = vpop.f32.mrb[0].mxu0
      %536 = vdwg.mxu0
      %v537 = vsel %vm261, %v532, -1e+30
      %v538 = vsel %vm266, %v537, -inf
      %539 = vmax.xlane.f32.xlu0 %v538
      %v540 = vpop.xlane.xlu0 %539
      %v541 = vsub.f32 %v537, %v540
      %v542 = vmul.f32 %v541, 1.442695
      %v543 = vpow.pop %v542
      %v544 = vsel %vm266, %v543, 0.0
      %545 = vadd.xlane.f32.xlu0 %v544
      %v546 = vpop.xlane.xlu0 %545
      %v547 = vrcp.pop %v546
      %v548 = vmul.f32 %v543, %v547
      %v549 = vpack.c.bf16 %v548, %v548
      %550 = vrot.lane.b32.xlu0 %v265, 112
      %v551 = vpop.permute.xlu0 %550
      %v553 = vsel %vm266, %v549, 0
      %v556 = vsel %vm329, %v551, 0
      %558 = vmatprep.subr.bf16.mxu0 0
      %559 = vmatpush1.bf16.msra.mxu0 %v556
      %560 = vmatprep.subr.bf16.mxu0 0
      %561 = vmatpush1.bf16.msra.mxu0 0
      %562 = vmatprep.subr.bf16.mxu0 0
      %563 = vmatpush1.bf16.msra.mxu0 0
      %564 = vmatprep.subr.bf16.mxu0 0
      %565 = vmatpush1.bf16.msra.mxu0 0
      %566 = vmatprep.subr.bf16.mxu0 0
      %567 = vmatpush1.bf16.msra.mxu0 0
      %568 = vmatprep.subr.bf16.mxu0 0
      %569 = vmatpush1.bf16.msra.mxu0 0
      %570 = vmatprep.subr.bf16.mxu0 0
      %571 = vmatpush1.bf16.msra.mxu0 0
      %572 = vmatprep.subr.bf16.mxu0 0
      %573 = vmatpush1.bf16.msra.mxu0 0
      %574 = vmatprep.subr.bf16.mxu0 0
      %575 = vmatpush1.bf16.msra.mxu0 0
      %576 = vmatprep.subr.bf16.mxu0 0
      %577 = vmatpush1.bf16.msra.mxu0 0
      %578 = vmatprep.subr.bf16.mxu0 0
      %579 = vmatpush1.bf16.msra.mxu0 0
      %580 = vmatprep.subr.bf16.mxu0 0
      %581 = vmatpush1.bf16.msra.mxu0 0
      %582 = vmatprep.subr.bf16.mxu0 0
      %583 = vmatpush1.bf16.msra.mxu0 0
      %584 = vmatprep.subr.bf16.mxu0 0
      %585 = vmatpush1.bf16.msra.mxu0 0
      %586 = vmatprep.subr.bf16.mxu0 0
      %587 = vmatpush1.bf16.msra.mxu0 0
      %588 = vmatprep.subr.bf16.mxu0 0
      %589 = vmatpush1.bf16.msra.mxu0 0
      %590 = vmatprep.mubr.bf16.mxu0 0
      %591 = vmatmul.mubr.bf16.gmra.mrb[0].mxu0 %v553
      %v592 = vpop.f32.mrb[0].mxu0
      %v593 = vadd.f32 0.0, %v592
      %v594 = vpop.f32.mrb[0].mxu0
      %v595 = vpop.f32.mrb[0].mxu0
      %v596 = vpop.f32.mrb[0].mxu0
      %597 = vdwg.mxu0
      %598 = vrot.lane.b32.xlu0 %v263, 104
      %v599 = vpop.permute.xlu0 %598
      %600 = vrot.lane.b32.xlu0 %v264, 104
      %v601 = vpop.permute.xlu0 %600
      %v603 = vsel %vm266, %v599, 0
      %v606 = vsel %vm266, %v601, 0
      %608 = vmatprep.subr.bf16.mxu0 0
      %609 = vmatpush1.bf16.xpose.msra.mxu0 %v606
      %610 = vmatprep.subr.bf16.mxu0 0
      %611 = vmatpush1.bf16.xpose.msra.mxu0 0
      %612 = vmatprep.subr.bf16.mxu0 0
      %613 = vmatpush1.bf16.xpose.msra.mxu0 0
      %614 = vmatprep.subr.bf16.mxu0 0
      %615 = vmatpush1.bf16.xpose.msra.mxu0 0
      %616 = vmatprep.subr.bf16.mxu0 0
      %617 = vmatpush1.bf16.xpose.msra.mxu0 0
      %618 = vmatprep.subr.bf16.mxu0 0
      %619 = vmatpush1.bf16.xpose.msra.mxu0 0
      %620 = vmatprep.subr.bf16.mxu0 0
      %621 = vmatpush1.bf16.xpose.msra.mxu0 0
      %622 = vmatprep.subr.bf16.mxu0 0
      %623 = vmatpush1.bf16.xpose.msra.mxu0 0
      %624 = vmatprep.subr.bf16.mxu0 0
      %625 = vmatpush1.bf16.xpose.msra.mxu0 0
      %626 = vmatprep.subr.bf16.mxu0 0
      %627 = vmatpush1.bf16.xpose.msra.mxu0 0
      %628 = vmatprep.subr.bf16.mxu0 0
      %629 = vmatpush1.bf16.xpose.msra.mxu0 0
      %630 = vmatprep.subr.bf16.mxu0 0
      %631 = vmatpush1.bf16.xpose.msra.mxu0 0
      %632 = vmatprep.subr.bf16.mxu0 0
      %633 = vmatpush1.bf16.xpose.msra.mxu0 0
      %634 = vmatprep.subr.bf16.mxu0 0
      %635 = vmatpush1.bf16.xpose.msra.mxu0 0
      %636 = vmatprep.subr.bf16.mxu0 0
      %637 = vmatpush1.bf16.xpose.msra.mxu0 0
      %638 = vmatprep.subr.bf16.mxu0 0
      %639 = vmatpush1.bf16.xpose.msra.mxu0 0
      %640 = vmatprep.mubr.bf16.mxu0 0
      %641 = vmatmul.mubr.bf16.gmra.mrb[0].mxu0 %v603
      %v642 = vpop.f32.mrb[0].mxu0
      %v643 = vadd.f32 0.0, %v642
      %v644 = vpop.f32.mrb[0].mxu0
      %v645 = vpop.f32.mrb[0].mxu0
      %v646 = vpop.f32.mrb[0].mxu0
      %647 = vdwg.mxu0
      %v648 = vsel %vm261, %v643, -1e+30
      %v649 = vsel %vm266, %v648, -inf
      %650 = vmax.xlane.f32.xlu0 %v649
      %v651 = vpop.xlane.xlu0 %650
      %v652 = vsub.f32 %v648, %v651
      %v653 = vmul.f32 %v652, 1.442695
      %v654 = vpow.pop %v653
      %v655 = vsel %vm266, %v654, 0.0
      %656 = vadd.xlane.f32.xlu0 %v655
      %v657 = vpop.xlane.xlu0 %656
      %v658 = vrcp.pop %v657
      %v659 = vmul.f32 %v654, %v658
      %v660 = vpack.c.bf16 %v659, %v659
      %661 = vrot.lane.b32.xlu0 %v265, 104
      %v662 = vpop.permute.xlu0 %661
      %v664 = vsel %vm266, %v660, 0
      %v667 = vsel %vm329, %v662, 0
      %669 = vmatprep.subr.bf16.mxu0 0
      %670 = vmatpush1.bf16.msra.mxu0 %v667
      %671 = vmatprep.subr.bf16.mxu0 0
      %672 = vmatpush1.bf16.msra.mxu0 0
      %673 = vmatprep.subr.bf16.mxu0 0
      %674 = vmatpush1.bf16.msra.mxu0 0
      %675 = vmatprep.subr.bf16.mxu0 0
      %676 = vmatpush1.bf16.msra.mxu0 0
      %677 = vmatprep.subr.bf16.mxu0 0
      %678 = vmatpush1.bf16.msra.mxu0 0
      %679 = vmatprep.subr.bf16.mxu0 0
      %680 = vmatpush1.bf16.msra.mxu0 0
      %681 = vmatprep.subr.bf16.mxu0 0
      %682 = vmatpush1.bf16.msra.mxu0 0
      %683 = vmatprep.subr.bf16.mxu0 0
      %684 = vmatpush1.bf16.msra.mxu0 0
      %685 = vmatprep.subr.bf16.mxu0 0
      %686 = vmatpush1.bf16.msra.mxu0 0
      %687 = vmatprep.subr.bf16.mxu0 0
      %688 = vmatpush1.bf16.msra.mxu0 0
      %689 = vmatprep.subr.bf16.mxu0 0
      %690 = vmatpush1.bf16.msra.mxu0 0
      %691 = vmatprep.subr.bf16.mxu0 0
      %692 = vmatpush1.bf16.msra.mxu0 0
      %693 = vmatprep.subr.bf16.mxu0 0
      %694 = vmatpush1.bf16.msra.mxu0 0
      %695 = vmatprep.subr.bf16.mxu0 0
      %696 = vmatpush1.bf16.msra.mxu0 0
      %697 = vmatprep.subr.bf16.mxu0 0
      %698 = vmatpush1.bf16.msra.mxu0 0
      %699 = vmatprep.subr.bf16.mxu0 0
      %700 = vmatpush1.bf16.msra.mxu0 0
      %701 = vmatprep.mubr.bf16.mxu0 0
      %702 = vmatmul.mubr.bf16.gmra.mrb[0].mxu0 %v664
      %v703 = vpop.f32.mrb[0].mxu0
      %v704 = vadd.f32 0.0, %v703
      %v705 = vpop.f32.mrb[0].mxu0
      %v706 = vpop.f32.mrb[0].mxu0
      %v707 = vpop.f32.mrb[0].mxu0
      %708 = vdwg.mxu0
      %710 = vrot.lane.b32.xlu0 %v482, 8
      %v711 = vpop.permute.xlu0 %710
      %714 = vrot.lane.b32.xlu0 %v593, 16
      %v715 = vpop.permute.xlu0 %714
      %718 = vrot.lane.b32.xlu0 %v704, 24
      %v719 = vpop.permute.xlu0 %718
      %v721 = vsel %vm266, %v368, %v711
      %vm722 = vcmask 130048
      %v723 = vsel %vm722, %v721, %v715
      %vm724 = vcmask 195584
      %v725 = vsel %vm724, %v723, %v719
      %vm726 = vcmask 261120
      %727 = vst.msk [vmem:[%s252] sm:$0xff] %vm726, %v725
      %p728 = scmp.lt.s32.totalorder %s18, 1
      %s729 = scalar_select %p728, %s18, 1
      %p730 = scmp.lt.s32.totalorder %s19, 0
      %s731 = scalar_select %p730, %s19, 0
      %s732 = sadd.s32 %s731, %s729
      %s733 = smul.addr %s732, 8
      %s734 = scalar_lea.vmem %s3, %s733
      // Predicated region
      $region33: #{proj_timeseries_gpt2_forward.20} parent=31 // pred_check
        %p735 = pneg %p130
      $region34: #{proj_timeseries_gpt2_forward.20} parent=31 // pred_check_branch
        %737 = sbr.rel (%p735) target = $region36
      $region35: #{proj_timeseries_gpt2_forward.20} parent=31 // pred_region
        _
      $region36: #{proj_timeseries_gpt2_forward.20} parent=31 // pred_fallthru
        _
    $region32: #{proj_timeseries_gpt2_forward.20} parent=5 // pred_fallthru
      _
    %p738 = scmp.le.s32.totalorder 2, %s9
    // Predicated region
    $region37: #{proj_timeseries_gpt2_forward.20} parent=5 // pred_check
      %p739 = pneg %p738
    $region38: #{proj_timeseries_gpt2_forward.20} parent=5 // pred_check_branch
      %741 = sbr.rel (%p739) target = $region40
    $region39: #{proj_timeseries_gpt2_forward.20} parent=5 // pred_region
      %s742 = ssub.s32 %s9, 2
      // Predicated region
      $region41: #{proj_timeseries_gpt2_forward.20} parent=39 // pred_check
        %p743 = pneg %p136
      $region42: #{proj_timeseries_gpt2_forward.20} parent=39 // pred_check_branch
        %745 = sbr.rel (%p743) target = $region44
      $region43: #{proj_timeseries_gpt2_forward.20} parent=39 // pred_region
        %p746 = scmp.lt.s32.totalorder %s20, 1
        %s747 = scalar_select %p746, %s20, 1
        %p748 = scmp.lt.s32.totalorder %s21, 0
        %s749 = scalar_select %p748, %s21, 0
        %s750 = sadd.s32 %s749, %s747
        %s751 = smul.addr %s750, 8
        %s752 = scalar_lea.vmem %s3, %s751
      $region44: #{proj_timeseries_gpt2_forward.20} parent=39 // pred_fallthru
        _
    $region40: #{proj_timeseries_gpt2_forward.20} parent=5 // pred_fallthru
      _
  $region6: #{proj_timeseries_gpt2_forward.20} parent=0 // loop_footer
    %s13 = sadd.s32 1, %s9
  $region7: #{proj_timeseries_gpt2_forward.20} parent=0 // loop_footer_branch
    %8 = sbr.rel target = $region3
  $region8: #{proj_timeseries_gpt2_forward.20} parent=0 // loop_exit
    _

// kernel: proj_timeseries_gpt2_forward.31
$region0: #{proj_timeseries_gpt2_forward.31}
  #allocation0 [shape = 'u32[]', space=smem, size = 0x4, offset = 0x4, fixed_abs, tag = 'smem constant byte address 0x4 - core index']
  #allocation1 [shape = 'u32[144,128]{1,0:T(1,128)}', space=vmem, size = 0x12000, scoped, tag = 'internal scratch']
  %s0 = inlined_call_operand.vmem [shape: f32[16,32], index: 0, kind: input, shape index: {}]
  %s1 = inlined_call_operand.vmem [shape: f32[1,32], index: 1, kind: input, shape index: {}]
  %s2 = inlined_call_operand.vmem [shape: f32[1,32], index: 2, kind: input, shape index: {}]
  %s3 = inlined_call_operand.hbm [shape: f32[16,32], index: 3, kind: output, shape index: {}]
  %s4 = sld [smem:[#allocation0]]
  $region22: #{proj_timeseries_gpt2_forward.31} parent=0
    _
  %s6 = ssub.s32 1, %s4
  %s7 = scalar_select 0, %s6, %s4
  $region1: #{proj_timeseries_gpt2_forward.31} parent=0
    #allocation2 [shape = 'u8[8192]{0}', space=vmem, size = 0x2000, scoped, tag = 'output window, operand 0, single buffered']
    #allocation3 [shape = 's32[1]{0}', space=sflag, size = 0x4, scoped, tag = 'scoped memory for proj_timeseries_gpt2_forward.31']
    %8 = vsyncpa [#allocation3], 0
    // Predicated region
    $region2: #{proj_timeseries_gpt2_forward.31} parent=1 // pred_check
      _
    $region3: #{proj_timeseries_gpt2_forward.31} parent=1 // pred_check_branch
      %10 = sbr.rel (0) target = $region5
    $region4: #{proj_timeseries_gpt2_forward.31} parent=1 // pred_region
      _
    $region5: #{proj_timeseries_gpt2_forward.31} parent=1 // pred_fallthru
      _
    // Predicated region
    $region6: #{proj_timeseries_gpt2_forward.31} parent=1 // pred_check
      _
    $region7: #{proj_timeseries_gpt2_forward.31} parent=1 // pred_check_branch
      %12 = sbr.rel (0) target = $region9
    $region8: #{proj_timeseries_gpt2_forward.31} parent=1 // pred_region
      _
    $region9: #{proj_timeseries_gpt2_forward.31} parent=1 // pred_fallthru
      _
    // Predicated region
    $region10: #{proj_timeseries_gpt2_forward.31} parent=1 // pred_check
      _
    $region11: #{proj_timeseries_gpt2_forward.31} parent=1 // pred_check_branch
      %14 = sbr.rel (0) target = $region13
    $region12: #{proj_timeseries_gpt2_forward.31} parent=1 // pred_region
      _
    $region13: #{proj_timeseries_gpt2_forward.31} parent=1 // pred_fallthru
      _
    %v15 = vld [vmem:[%s0] sm:$0xff]
    %v16 = vld [vmem:[%s0 + $0x8] sm:$0xff]
    %vm17 = vcmask 261120
    %v18 = vsel %vm17, %v15, 0.0
    %19 = vadd.xlane.f32.xlu0 %v18
    %v20 = vpop.xlane.xlu0 %19
    %v21 = vsel %vm17, %v16, 0.0
    %22 = vadd.xlane.f32.xlu0 %v21
    %v23 = vpop.xlane.xlu0 %22
    %v24 = vrcp.pop 32.0
    %v25 = vmul.f32 %v20, %v24
    %v26 = vmul.f32 %v23, %v24
    %v27 = vsub.f32 %v15, %v25
    %v28 = vsub.f32 %v16, %v26
    %v29 = vmul.f32 %v27, %v27
    %v30 = vmul.f32 %v28, %v28
    %v31 = vsel %vm17, %v29, 0.0
    %32 = vadd.xlane.f32.xlu0 %v31
    %v33 = vpop.xlane.xlu0 %32
    %v34 = vsel %vm17, %v30, 0.0
    %35 = vadd.xlane.f32.xlu0 %v34
    %v36 = vpop.xlane.xlu0 %35
    %v37 = vmul.f32 %v33, %v24
    %v38 = vmul.f32 %v36, %v24
    %v39 = vadd.f32 %v37, 1e-05
    %v40 = vadd.f32 %v38, 1e-05
    %v41 = vrsqrt.pop %v39
    %v42 = vrsqrt.pop %v40
    %v43 = vmul.f32 %v27, %v41
    %v44 = vmul.f32 %v28, %v42
    %v45 = vld [vmem:[%s1] sm:$0x1]
    %v47 = vlaneseq
    %v48 = vshrl.u32 %v47, 7
    %v49 = vsub.s32 0, %v48
    %v50 = vrot.slane %v45, %v49
    %v52 = vmul.f32 %v43, %v50
    %v53 = vmul.f32 %v44, %v50
    %v54 = vld [vmem:[%s2] sm:$0x1]
    %v56 = vlaneseq
    %v57 = vshrl.u32 %v56, 7
    %v58 = vsub.s32 0, %v57
    %v59 = vrot.slane %v54, %v58
    %v61 = vadd.f32 %v52, %v59
    %v62 = vadd.f32 %v53, %v59
    %63 = vst.msk [vmem:[#allocation2] sm:$0xff] %vm17, %v61
    %64 = vst.msk [vmem:[#allocation2 + $0x8] sm:$0xff] %vm17, %v62
    // Predicated region
    $region14: #{proj_timeseries_gpt2_forward.31} parent=1 // pred_check
      _
    $region15: #{proj_timeseries_gpt2_forward.31} parent=1 // pred_check_branch
      %66 = sbr.rel (0) target = $region17
    $region16: #{proj_timeseries_gpt2_forward.31} parent=1 // pred_region
      %s68 = ssub.s32 256, 256
      %69 = vsyncadd [#allocation3], %s68
      %s70 = sshll.u32 [#allocation2], 4
      %s71 = int_to_ptr.vmem [resolvable:$true] %s70
      %76 = dma.vmem_to_hbm [thread:$0]  %s71, 256, %s3, [#allocation3], 128, 128, 8
    $region17: #{proj_timeseries_gpt2_forward.31} parent=1 // pred_fallthru
      _
    // Predicated region
    $region18: #{proj_timeseries_gpt2_forward.31} parent=1 // pred_check
      _
    $region19: #{proj_timeseries_gpt2_forward.31} parent=1 // pred_check_branch
      %78 = sbr.rel (0) target = $region21
    $region20: #{proj_timeseries_gpt2_forward.31} parent=1 // pred_region
      %79 = dma.done [#allocation3], 256
    $region21: #{proj_timeseries_gpt2_forward.31} parent=1 // pred_fallthru
      _
    %80 = vsyncpa [#allocation3], 1

// kernel: proj_timeseries_gpt2_forward.22
$region0: #{proj_timeseries_gpt2_forward.22}
  #allocation0 [shape = 'u32[]', space=smem, size = 0x4, offset = 0x4, fixed_abs, tag = 'smem constant byte address 0x4 - core index']
  #allocation1 [shape = 'u32[144,128]{1,0:T(1,128)}', space=vmem, size = 0x12000, scoped, tag = 'internal scratch']
  %s0 = inlined_call_operand.vmem [shape: f32[16,32], index: 0, kind: input, shape index: {}]
  %s1 = inlined_call_operand.vmem [shape: f32[1,32], index: 1, kind: input, shape index: {}]
  %s2 = inlined_call_operand.vmem [shape: f32[1,32], index: 2, kind: input, shape index: {}]
  %s3 = inlined_call_operand.vmem [shape: f32[32,128], index: 3, kind: input, shape index: {}]
  %s4 = inlined_call_operand.vmem [shape: f32[1,128], index: 4, kind: input, shape index: {}]
  %s5 = inlined_call_operand.vmem [shape: f32[16,128], index: 5, kind: output, shape index: {}]
  %s6 = sld [smem:[#allocation0]]
  $region30: #{proj_timeseries_gpt2_forward.22} parent=0
    _
  %s8 = ssub.s32 1, %s6
  %s9 = scalar_select 0, %s8, %s6
  // Predicated region
  $region2: #{proj_timeseries_gpt2_forward.22} parent=0 // pred_check
    _
  $region3: #{proj_timeseries_gpt2_forward.22} parent=0 // pred_check_branch
    %11 = sbr.rel (0) target = $region5
  $region4: #{proj_timeseries_gpt2_forward.22} parent=0 // pred_region
    _
  $region5: #{proj_timeseries_gpt2_forward.22} parent=0 // pred_fallthru
    _
  // Predicated region
  $region6: #{proj_timeseries_gpt2_forward.22} parent=0 // pred_check
    _
  $region7: #{proj_timeseries_gpt2_forward.22} parent=0 // pred_check_branch
    %13 = sbr.rel (0) target = $region9
  $region8: #{proj_timeseries_gpt2_forward.22} parent=0 // pred_region
    _
  $region9: #{proj_timeseries_gpt2_forward.22} parent=0 // pred_fallthru
    _
  // Predicated region
  $region10: #{proj_timeseries_gpt2_forward.22} parent=0 // pred_check
    _
  $region11: #{proj_timeseries_gpt2_forward.22} parent=0 // pred_check_branch
    %15 = sbr.rel (0) target = $region13
  $region12: #{proj_timeseries_gpt2_forward.22} parent=0 // pred_region
    _
  $region13: #{proj_timeseries_gpt2_forward.22} parent=0 // pred_fallthru
    _
  // Predicated region
  $region14: #{proj_timeseries_gpt2_forward.22} parent=0 // pred_check
    _
  $region15: #{proj_timeseries_gpt2_forward.22} parent=0 // pred_check_branch
    %17 = sbr.rel (0) target = $region17
  $region16: #{proj_timeseries_gpt2_forward.22} parent=0 // pred_region
    _
  $region17: #{proj_timeseries_gpt2_forward.22} parent=0 // pred_fallthru
    _
  // Predicated region
  $region18: #{proj_timeseries_gpt2_forward.22} parent=0 // pred_check
    _
  $region19: #{proj_timeseries_gpt2_forward.22} parent=0 // pred_check_branch
    %19 = sbr.rel (0) target = $region21
  $region20: #{proj_timeseries_gpt2_forward.22} parent=0 // pred_region
    _
  $region21: #{proj_timeseries_gpt2_forward.22} parent=0 // pred_fallthru
    _
  %v21 = vld [vmem:[%s0] sm:$0xff]
  %v22 = vld [vmem:[%s0 + $0x8] sm:$0xff]
  %vm23 = vcmask 261120
  %v24 = vsel %vm23, %v21, 0.0
  %25 = vadd.xlane.f32.xlu0 %v24
  %v26 = vpop.xlane.xlu0 %25
  %v27 = vsel %vm23, %v22, 0.0
  %28 = vadd.xlane.f32.xlu0 %v27
  %v29 = vpop.xlane.xlu0 %28
  %v30 = vrcp.pop 32.0
  %v31 = vmul.f32 %v26, %v30
  %v32 = vmul.f32 %v29, %v30
  %v33 = vsub.f32 %v21, %v31
  %v34 = vsub.f32 %v22, %v32
  %v35 = vmul.f32 %v33, %v33
  %v36 = vmul.f32 %v34, %v34
  %v37 = vsel %vm23, %v35, 0.0
  %38 = vadd.xlane.f32.xlu0 %v37
  %v39 = vpop.xlane.xlu0 %38
  %v40 = vsel %vm23, %v36, 0.0
  %41 = vadd.xlane.f32.xlu0 %v40
  %v42 = vpop.xlane.xlu0 %41
  %v43 = vmul.f32 %v39, %v30
  %v44 = vmul.f32 %v42, %v30
  %v45 = vadd.f32 %v43, 1e-05
  %v46 = vadd.f32 %v44, 1e-05
  %v47 = vrsqrt.pop %v45
  %v48 = vrsqrt.pop %v46
  %v49 = vmul.f32 %v33, %v47
  %v50 = vmul.f32 %v34, %v48
  %v51 = vld [vmem:[%s1] sm:$0x1]
  %v53 = vlaneseq
  %v54 = vshrl.u32 %v53, 7
  %v55 = vsub.s32 0, %v54
  %v56 = vrot.slane %v51, %v55
  %v58 = vmul.f32 %v49, %v56
  %v59 = vmul.f32 %v50, %v56
  %v60 = vld [vmem:[%s2] sm:$0x1]
  %v62 = vlaneseq
  %v63 = vshrl.u32 %v62, 7
  %v64 = vsub.s32 0, %v63
  %v65 = vrot.slane %v60, %v64
  %v67 = vadd.f32 %v58, %v65
  %v68 = vadd.f32 %v59, %v65
  %v69 = vpack.c.bf16 %v68, %v67
  %v70 = vld [vmem:[%s3] sm:$0xff]
  %v71 = vld [vmem:[%s3 + $0x8] sm:$0xff]
  %v72 = vld [vmem:[%s3 + $0x10] sm:$0xff]
  %v73 = vld [vmem:[%s3 + $0x18] sm:$0xff]
  %v74 = vpack.c.bf16 %v71, %v70
  %v75 = vpack.c.bf16 %v73, %v72
  %v76 = vld [vmem:[%s4] sm:$0x1]
  %v78 = vlaneseq
  %v79 = vshrl.u32 %v78, 7
  %v80 = vsub.s32 0, %v79
  %v81 = vrot.slane %v76, %v80
  %v84 = vsel %vm23, %v69, 0
  %86 = vmatprep.subr.bf16.mxu0 0
  %87 = vmatpush1.bf16.msra.mxu0 %v74
  %88 = vmatprep.subr.bf16.mxu0 0
  %89 = vmatpush1.bf16.msra.mxu0 %v75
  %90 = vmatprep.subr.bf16.mxu0 0
  %91 = vmatpush1.bf16.msra.mxu0 0
  %92 = vmatprep.subr.bf16.mxu0 0
  %93 = vmatpush1.bf16.msra.mxu0 0
  %94 = vmatprep.subr.bf16.mxu0 0
  %95 = vmatpush1.bf16.msra.mxu0 0
  %96 = vmatprep.subr.bf16.mxu0 0
  %97 = vmatpush1.bf16.msra.mxu0 0
  %98 = vmatprep.subr.bf16.mxu0 0
  %99 = vmatpush1.bf16.msra.mxu0 0
  %100 = vmatprep.subr.bf16.mxu0 0
  %101 = vmatpush1.bf16.msra.mxu0 0
  %102 = vmatprep.subr.bf16.mxu0 0
  %103 = vmatpush1.bf16.msra.mxu0 0
  %104 = vmatprep.subr.bf16.mxu0 0
  %105 = vmatpush1.bf16.msra.mxu0 0
  %106 = vmatprep.subr.bf16.mxu0 0
  %107 = vmatpush1.bf16.msra.mxu0 0
  %108 = vmatprep.subr.bf16.mxu0 0
  %109 = vmatpush1.bf16.msra.mxu0 0
  %110 = vmatprep.subr.bf16.mxu0 0
  %111 = vmatpush1.bf16.msra.mxu0 0
  %112 = vmatprep.subr.bf16.mxu0 0
  %113 = vmatpush1.bf16.msra.mxu0 0
  %114 = vmatprep.subr.bf16.mxu0 0
  %115 = vmatpush1.bf16.msra.mxu0 0
  %116 = vmatprep.subr.bf16.mxu0 0
  %117 = vmatpush1.bf16.msra.mxu0 0
  %118 = vmatprep.mubr.bf16.mxu0 0
  %119 = vmatmul.mubr.bf16.gmra.mrb[0].mxu0 %v84
  %v120 = vpop.f32.mrb[0].mxu0
  %v121 = vadd.f32 %v81, %v120
  %v122 = vpop.f32.mrb[0].mxu0
  %v123 = vpop.f32.mrb[0].mxu0
  %v124 = vadd.f32 %v81, %v123
  %v125 = vpop.f32.mrb[0].mxu0
  %126 = vdwg.mxu0
  %v127 = vmul.f32 %v121, 0.5
  %v128 = vmul.f32 %v124, 0.5
  %v129 = vmul.f32 %v121, 0.044715
  %v130 = vmul.f32 %v124, 0.044715
  %v131 = vmul.f32 %v129, %v121
  %v132 = vmul.f32 %v130, %v124
  %v133 = vmul.f32 %v131, %v121
  %v134 = vmul.f32 %v132, %v124
  %v135 = vadd.f32 %v121, %v133
  %v136 = vadd.f32 %v124, %v134
  %v137 = vmul.f32 %v135, 0.7978845
  %v138 = vmul.f32 %v136, 0.7978845
  %v139 = vtanh.pop %v137
  %v140 = vtanh.pop %v138
  %v141 = vadd.f32 %v139, 1.0
  %v142 = vadd.f32 %v140, 1.0
  %v143 = vmul.f32 %v127, %v141
  %v144 = vmul.f32 %v128, %v142
  %145 = vst [vmem:[%s5] sm:$0xff] %v143
  %146 = vst [vmem:[%s5 + $0x8] sm:$0xff] %v144
  // Predicated region
  $region22: #{proj_timeseries_gpt2_forward.22} parent=0 // pred_check
    _
  $region23: #{proj_timeseries_gpt2_forward.22} parent=0 // pred_check_branch
    %148 = sbr.rel (0) target = $region25
  $region24: #{proj_timeseries_gpt2_forward.22} parent=0 // pred_region
    _
  $region25: #{proj_timeseries_gpt2_forward.22} parent=0 // pred_fallthru
    _
  // Predicated region
  $region26: #{proj_timeseries_gpt2_forward.22} parent=0 // pred_check
    _
  $region27: #{proj_timeseries_gpt2_forward.22} parent=0 // pred_check_branch
    %150 = sbr.rel (0) target = $region29
  $region28: #{proj_timeseries_gpt2_forward.22} parent=0 // pred_region
    _
  $region29: #{proj_timeseries_gpt2_forward.22} parent=0 // pred_fallthru
    _

// kernel: proj_timeseries_gpt2_forward.23
$region0: #{proj_timeseries_gpt2_forward.23}
  #allocation0 [shape = 'u32[]', space=smem, size = 0x4, offset = 0x4, fixed_abs, tag = 'smem constant byte address 0x4 - core index']
  #allocation1 [shape = 'u32[144,128]{1,0:T(1,128)}', space=vmem, size = 0x12000, scoped, tag = 'internal scratch']
  #allocation2 [shape = 'f32[16,32]{1,0:T(8,128)}', space=vmem, size = 0x2000, scoped, tag = 'scratch operand']
  %s0 = inlined_call_operand.vmem [shape: f32[16,128], index: 0, kind: input, shape index: {}]
  %s1 = inlined_call_operand.vmem [shape: f32[128,32], index: 1, kind: input, shape index: {}]
  %s2 = inlined_call_operand.vmem [shape: f32[1,32], index: 2, kind: input, shape index: {}]
  %s3 = inlined_call_operand.vmem [shape: f32[16,32], index: 3, kind: input, shape index: {}]
  %s4 = inlined_call_operand.vmem [shape: f32[16,32], index: 4, kind: output, shape index: {}]
  %s5 = sld [smem:[#allocation0]]
  $region34: #{proj_timeseries_gpt2_forward.23} parent=0
    _
  %s7 = ssub.s32 1, %s5
  %s8 = scalar_select 0, %s7, %s5
  // Predicated region
  $region2: #{proj_timeseries_gpt2_forward.23} parent=0 // pred_check
    _
  $region3: #{proj_timeseries_gpt2_forward.23} parent=0 // pred_check_branch
    %10 = sbr.rel (0) target = $region5
  $region4: #{proj_timeseries_gpt2_forward.23} parent=0 // pred_region
    _
  $region5: #{proj_timeseries_gpt2_forward.23} parent=0 // pred_fallthru
    _
  // Predicated region
  $region6: #{proj_timeseries_gpt2_forward.23} parent=0 // pred_check
    _
  $region7: #{proj_timeseries_gpt2_forward.23} parent=0 // pred_check_branch
    %12 = sbr.rel (0) target = $region9
  $region8: #{proj_timeseries_gpt2_forward.23} parent=0 // pred_region
    _
  $region9: #{proj_timeseries_gpt2_forward.23} parent=0 // pred_fallthru
    _
  // Predicated region
  $region10: #{proj_timeseries_gpt2_forward.23} parent=0 // pred_check
    _
  $region11: #{proj_timeseries_gpt2_forward.23} parent=0 // pred_check_branch
    %14 = sbr.rel (0) target = $region13
  $region12: #{proj_timeseries_gpt2_forward.23} parent=0 // pred_region
    _
  $region13: #{proj_timeseries_gpt2_forward.23} parent=0 // pred_fallthru
    _
  // Predicated region
  $region14: #{proj_timeseries_gpt2_forward.23} parent=0 // pred_check
    _
  $region15: #{proj_timeseries_gpt2_forward.23} parent=0 // pred_check_branch
    %16 = sbr.rel (0) target = $region17
  $region16: #{proj_timeseries_gpt2_forward.23} parent=0 // pred_region
    _
  $region17: #{proj_timeseries_gpt2_forward.23} parent=0 // pred_fallthru
    _
  %p18 = scmp.eq.s32.totalorder 0, 0
  // Predicated region
  $region18: #{proj_timeseries_gpt2_forward.23} parent=0 // pred_check
    %p19 = pneg %p18
  $region19: #{proj_timeseries_gpt2_forward.23} parent=0 // pred_check_branch
    %21 = sbr.rel (%p19) target = $region21
  $region20: #{proj_timeseries_gpt2_forward.23} parent=0 // pred_region
    %vm22 = vcmask 261120
    %23 = vst.msk [vmem:[#allocation2] sm:$0xff] %vm22, 0.0
    %24 = vst.msk [vmem:[#allocation2 + $0x8] sm:$0xff] %vm22, 0.0
  $region21: #{proj_timeseries_gpt2_forward.23} parent=0 // pred_fallthru
    _
  %v25 = vld [vmem:[#allocation2] sm:$0xff]
  %v26 = vld [vmem:[#allocation2 + $0x8] sm:$0xff]
  %v27 = vld [vmem:[%s0] sm:$0xff]
  %v28 = vld [vmem:[%s0 + $0x8] sm:$0xff]
  %v29 = vpack.c.bf16 %v28, %v27
  %v30 = vld [vmem:[%s1] sm:$0xff]
  %v31 = vld [vmem:[%s1 + $0x8] sm:$0xff]
  %v32 = vld [vmem:[%s1 + $0x10] sm:$0xff]
  %v33 = vld [vmem:[%s1 + $0x18] sm:$0xff]
  %v34 = vld [vmem:[%s1 + $0x20] sm:$0xff]
  %v35 = vld [vmem:[%s1 + $0x28] sm:$0xff]
  %v36 = vld [vmem:[%s1 + $0x30] sm:$0xff]
  %v37 = vld [vmem:[%s1 + $0x38] sm:$0xff]
  %v38 = vld [vmem:[%s1 + $0x40] sm:$0xff]
  %v39 = vld [vmem:[%s1 + $0x48] sm:$0xff]
  %v40 = vld [vmem:[%s1 + $0x50] sm:$0xff]
  %v41 = vld [vmem:[%s1 + $0x58] sm:$0xff]
  %v42 = vld [vmem:[%s1 + $0x60] sm:$0xff]
  %v43 = vld [vmem:[%s1 + $0x68] sm:$0xff]
  %v44 = vld [vmem:[%s1 + $0x70] sm:$0xff]
  %v45 = vld [vmem:[%s1 + $0x78] sm:$0xff]
  %v46 = vpack.c.bf16 %v31, %v30
  %v47 = vpack.c.bf16 %v33, %v32
  %v48 = vpack.c.bf16 %v35, %v34
  %v49 = vpack.c.bf16 %v37, %v36
  %v50 = vpack.c.bf16 %v39, %v38
  %v51 = vpack.c.bf16 %v41, %v40
  %v52 = vpack.c.bf16 %v43, %v42
  %v53 = vpack.c.bf16 %v45, %v44
  %54 = vmatprep.subr.bf16.mxu0 0
  %55 = vmatpush1.bf16.msra.mxu0 %v46
  %56 = vmatprep.subr.bf16.mxu0 0
  %57 = vmatpush1.bf16.msra.mxu0 %v47
  %58 = vmatprep.subr.bf16.mxu0 0
  %59 = vmatpush1.bf16.msra.mxu0 %v48
  %60 = vmatprep.subr.bf16.mxu0 0
  %61 = vmatpush1.bf16.msra.mxu0 %v49
  %62 = vmatprep.subr.bf16.mxu0 0
  %63 = vmatpush1.bf16.msra.mxu0 %v50
  %64 = vmatprep.subr.bf16.mxu0 0
  %65 = vmatpush1.bf16.msra.mxu0 %v51
  %66 = vmatprep.subr.bf16.mxu0 0
  %67 = vmatpush1.bf16.msra.mxu0 %v52
  %68 = vmatprep.subr.bf16.mxu0 0
  %69 = vmatpush1.bf16.msra.mxu0 %v53
  %70 = vmatprep.subr.bf16.mxu0 0
  %71 = vmatpush1.bf16.msra.mxu0 0
  %72 = vmatprep.subr.bf16.mxu0 0
  %73 = vmatpush1.bf16.msra.mxu0 0
  %74 = vmatprep.subr.bf16.mxu0 0
  %75 = vmatpush1.bf16.msra.mxu0 0
  %76 = vmatprep.subr.bf16.mxu0 0
  %77 = vmatpush1.bf16.msra.mxu0 0
  %78 = vmatprep.subr.bf16.mxu0 0
  %79 = vmatpush1.bf16.msra.mxu0 0
  %80 = vmatprep.subr.bf16.mxu0 0
  %81 = vmatpush1.bf16.msra.mxu0 0
  %82 = vmatprep.subr.bf16.mxu0 0
  %83 = vmatpush1.bf16.msra.mxu0 0
  %84 = vmatprep.subr.bf16.mxu0 0
  %85 = vmatpush1.bf16.msra.mxu0 0
  %86 = vmatprep.mubr.bf16.mxu0 0
  %87 = vmatmul.mubr.bf16.gmra.mrb[0].mxu0 %v29
  %v88 = vpop.f32.mrb[0].mxu0
  %v89 = vadd.f32 0.0, %v88
  %v90 = vpop.f32.mrb[0].mxu0
  %v91 = vpop.f32.mrb[0].mxu0
  %v92 = vadd.f32 0.0, %v91
  %v93 = vpop.f32.mrb[0].mxu0
  %94 = vdwg.mxu0
  %v95 = vadd.f32 %v25, %v89
  %v96 = vadd.f32 %v26, %v92
  %vm97 = vcmask 261120
  %98 = vst.msk [vmem:[#allocation2] sm:$0xff] %vm97, %v95
  %99 = vst.msk [vmem:[#allocation2 + $0x8] sm:$0xff] %vm97, %v96
  // Predicated region
  $region22: #{proj_timeseries_gpt2_forward.23} parent=0 // pred_check
    %p100 = pneg %p18
  $region23: #{proj_timeseries_gpt2_forward.23} parent=0 // pred_check_branch
    %102 = sbr.rel (%p100) target = $region25
  $region24: #{proj_timeseries_gpt2_forward.23} parent=0 // pred_region
    %v103 = vld [vmem:[#allocation2] sm:$0xff]
    %v104 = vld [vmem:[#allocation2 + $0x8] sm:$0xff]
    %v105 = vld [vmem:[%s2] sm:$0x1]
    %v107 = vlaneseq
    %v108 = vshrl.u32 %v107, 7
    %v109 = vsub.s32 0, %v108
    %v110 = vrot.slane %v105, %v109
    %v112 = vadd.f32 %v103, %v110
    %v113 = vadd.f32 %v104, %v110
    %v114 = vld [vmem:[%s3] sm:$0xff]
    %v115 = vld [vmem:[%s3 + $0x8] sm:$0xff]
    %v116 = vadd.f32 %v112, %v114
    %v117 = vadd.f32 %v113, %v115
    %118 = vst.msk [vmem:[%s4] sm:$0xff] %vm97, %v116
    %119 = vst.msk [vmem:[%s4 + $0x8] sm:$0xff] %vm97, %v117
  $region25: #{proj_timeseries_gpt2_forward.23} parent=0 // pred_fallthru
    _
  // Predicated region
  $region26: #{proj_timeseries_gpt2_forward.23} parent=0 // pred_check
    _
  $region27: #{proj_timeseries_gpt2_forward.23} parent=0 // pred_check_branch
    %121 = sbr.rel (0) target = $region29
  $region28: #{proj_timeseries_gpt2_forward.23} parent=0 // pred_region
    _
  $region29: #{proj_timeseries_gpt2_forward.23} parent=0 // pred_fallthru
    _
  // Predicated region
  $region30: #{proj_timeseries_gpt2_forward.23} parent=0 // pred_check
    _
  $region31: #{proj_timeseries_gpt2_forward.23} parent=0 // pred_check_branch
    %123 = sbr.rel (0) target = $region33
  $region32: #{proj_timeseries_gpt2_forward.23} parent=0 // pred_region
    _
  $region33: #{proj_timeseries_gpt2_forward.23} parent=0 // pred_fallthru
    _

</llo_original>
